<compile_context>
chip_gen: v5e
topology: v5e:2x2
jax: 0.10.0
libtpu: 0.0.40
codegen_flags: <defaults>
</compile_context>

<pallas_src>
import functools

import jax
import jax.numpy as jnp
import numpy as np
from jax import lax
from jax.experimental import pallas as pl
from jax.experimental.pallas import tpu as pltpu

BN_EPS = 1e-5


def _round_up(x, m):
    return ((x + m - 1) // m) * m


def _pad_axis(a, axis, n):
    pads = [(0, 0)] * a.ndim
    pads[axis] = (0, n - a.shape[axis])
    return jnp.pad(a, pads)


# ----------------------------------------------------------------------------
# Fused Pallas kernel: whole encoder forward for TB samples per grid step.
# Activation layout: per-sample flattened row-major [row*w_row + col, channel]
# slabs of fixed length L1, stacked along the sublane axis into one
# [TB*L1, channel] slab.  Rows with col >= valid width / rows past the valid
# height hold finite garbage that is never read by valid outputs (padding was
# sized so all shifted slab reads stay inside each sample's own slab).
# ----------------------------------------------------------------------------
def _fused_encoder_kernel(p_ref, w1_ref, b1_ref, w2_ref, b2_ref, w3_ref, b3_ref,
                          pool_ref, w45_ref, b5_ref, o_ref, *,
                          w_row, m2, m3, ksize):
    cdt = w1_ref.dtype  # matmul-operand dtype (bf16 by default, f32 optional)

    # conv1 (stride 2, im2col'd on host) + folded BN + ReLU   -> [TB*L1, c1]
    a1 = jnp.dot(p_ref[...], w1_ref[...], preferred_element_type=jnp.float32)
    a1 = jnp.maximum(a1 + b1_ref[...], 0.0).astype(cdt)

    # conv2 (3x3, stride 1): 9 shifted sub-dots over the flat batch slab.
    acc2 = jnp.dot(a1[:m2], w2_ref[0], preferred_element_type=jnp.float32)
    for t in range(1, ksize * ksize):
        off = (t // ksize) * w_row + (t % ksize)
        acc2 = acc2 + jnp.dot(a1[off:off + m2], w2_ref[t],
                              preferred_element_type=jnp.float32)
    a2 = jnp.maximum(acc2 + b2_ref[...], 0.0).astype(cdt)

    # conv3 (3x3, stride 1)
    acc3 = jnp.dot(a2[:m3], w3_ref[0], preferred_element_type=jnp.float32)
    for t in range(1, ksize * ksize):
        off = (t // ksize) * w_row + (t % ksize)
        acc3 = acc3 + jnp.dot(a2[off:off + m3], w3_ref[t],
                              preferred_element_type=jnp.float32)
    a3 = jnp.maximum(acc3 + b3_ref[...], 0.0).astype(cdt)

    # AdaptiveAvgPool2d(1): one masked MXU dot with a host-built [TB, M3] matrix
    pooled = jnp.dot(pool_ref[...], a3, preferred_element_type=jnp.float32)

    # conv4 (1x1, no bias) folded through the mean into w45 = W4 @ W5; + b5, ReLU
    out = jnp.dot(pooled.astype(cdt), w45_ref[...],
                  preferred_element_type=jnp.float32) + b5_ref[...]
    o_ref[...] = jnp.maximum(out, 0.0).astype(o_ref.dtype)


# ----------------------------------------------------------------------------
# Host-side glue (first-layer im2col, BN folding, weight folding, padding)
# ----------------------------------------------------------------------------
def im2col(x_nhwc, k, stride):
    B, H, W, C = x_nhwc.shape
    OH = (H - k) // stride + 1
    OW = (W - k) // stride + 1
    cols = []
    for di in range(k):
        for dj in range(k):
            cols.append(x_nhwc[:, di:di + stride * OH:stride,
                               dj:dj + stride * OW:stride, :])
    patches = jnp.concatenate(cols, axis=-1)      # [B, OH, OW, k*k*C] (kh, kw, cin)
    return patches.reshape(B, OH * OW, k * k * C), (OH, OW)


def conv_w_to_mat(w_oihw):
    # torch [Cout, Cin, KH, KW] -> [KH*KW*Cin, Cout]  (matches im2col ordering)
    cout, cin, kh, kw = w_oihw.shape
    return jnp.transpose(w_oihw, (2, 3, 1, 0)).reshape(kh * kw * cin, cout)


def conv_w_to_offsets(w_oihw):
    # torch [Cout, Cin, KH, KW] -> [KH*KW, Cin, Cout]  (one slice per kernel offset)
    cout, cin, kh, kw = w_oihw.shape
    return jnp.transpose(w_oihw, (2, 3, 1, 0)).reshape(kh * kw, cin, cout)


def fold_bn(bn):
    scale = bn["gamma"] / jnp.sqrt(bn["var"] + BN_EPS)
    shift = bn["beta"] - bn["mean"] * scale
    return scale, shift


def raw_csi_encoder_forward(x_nchw, p, *, tb=16, use_bf16=True):
    x = jnp.transpose(x_nchw, (0, 2, 3, 1)).astype(jnp.float32)  # NHWC
    B, H, W, _ = x.shape
    k = 3
    OH1, OW1 = (H - k) // 2 + 1, (W - k) // 2 + 1
    OH2, OW2 = OH1 - (k - 1), OW1 - (k - 1)
    OH3, OW3 = OH2 - (k - 1), OW2 - (k - 1)
    w_row = OW1                                   # flattened row stride everywhere
    max_off = (k - 1) * w_row + (k - 1)           # largest in-kernel slab offset

    # Padded per-sample slab lengths so every static shifted slice stays inside
    # the sample's own slab (rounded to the sublane multiple of 8).
    L3 = _round_up((OH3 - 1) * w_row + OW3, 8)
    L2 = _round_up(max(L3 + max_off, (OH2 - 1) * w_row + OW2), 8)
    L1 = _round_up(max(L2 + max_off, OH1 * OW1), 8)

    # Samples per grid step: fill the MXU M dimension, but keep >=2 grid steps
    # when B allows so both v7x TensorCores get work.  TB is either B (tiny
    # batches) or a multiple of 8, keeping block shapes sublane-aligned.
    if B <= 8:
        TB = B
    else:
        TB = min(tb, _round_up((B + 1) // 2, 8))
    B_pad = _round_up(B, TB)
    G = B_pad // TB

    cdt = jnp.bfloat16 if use_bf16 else jnp.float32

    # Host-side im2col only for the stride-2 first conv (tiny operand); pad the
    # batch to B_pad and rows to L1 with zeros, then flatten to one big slab.
    patches, _ = im2col(x, k, 2)                                  # [B, OH1*OW1, 9*Cin]
    K1 = patches.shape[-1]
    patches = jnp.pad(patches, ((0, B_pad - B), (0, L1 - OH1 * OW1), (0, 0)))
    patches = patches.reshape(B_pad * L1, K1).astype(cdt)

    # Fold BN into conv weights (scale) and bias rows (shift).
    s1, sh1 = fold_bn(p["bn1"])
    s2, sh2 = fold_bn(p["bn2"])
    s3, sh3 = fold_bn(p["bn3"])
    w1 = conv_w_to_mat(p["w1"]) * s1[None, :]                     # [9*Cin, c1]
    w2 = conv_w_to_offsets(p["w2"]) * s2[None, None, :]           # [9, c1, c2]
    w3 = conv_w_to_offsets(p["w3"]) * s3[None, None, :]           # [9, c2, c3]
    # conv4 (1x1, linear) commutes with the spatial mean -> fold into final fc.
    w45 = conv_w_to_mat(p["w4"]) @ conv_w_to_mat(p["w5"])         # [c3, D]
    b5 = p["b5"][None, :]                                         # [1, D]

    # Zero-pad channel dims to multiples of 8 (numerically free).
    c1, c2, c3 = w1.shape[1], w2.shape[2], w3.shape[2]
    c1p, c2p, c3p = _round_up(c1, 8), _round_up(c2, 8), _round_up(c3, 8)
    w1 = _pad_axis(w1, 1, c1p)
    sh1 = _pad_axis(sh1, 0, c1p)
    w2 = _pad_axis(_pad_axis(w2, 1, c1p), 2, c2p)
    sh2 = _pad_axis(sh2, 0, c2p)
    w3 = _pad_axis(_pad_axis(w3, 1, c2p), 2, c3p)
    sh3 = _pad_axis(sh3, 0, c3p)
    w45 = _pad_axis(w45, 0, c3p)
    D = w45.shape[1]

    # Flat-slab extents per block (last sample's slab is truncated to L2 / L3).
    M2 = (TB - 1) * L1 + L2
    M3 = (TB - 1) * L1 + L3

    # AdaptiveAvgPool2d(1) mask matrix: selects each sample's OH3 x OW3 valid
    # conv3 outputs out of the flat slab and averages them, as one MXU dot.
    pool = np.zeros((TB, M3), np.float32)
    inv_pool = 1.0 / float(OH3 * OW3)
    for t in range(TB):
        for i in range(OH3):
            base = t * L1 + i * w_row
            pool[t, base:base + OW3] = inv_pool
    pool_mat = jnp.asarray(pool).astype(cdt)

    # Matmul operands in cdt (bf16 by default); biases / epilogue stay f32.
    w1c, w2c, w3c, w45c = (w1.astype(cdt), w2.astype(cdt),
                           w3.astype(cdt), w45.astype(cdt))
    b1 = sh1[None, :].astype(jnp.float32)
    b2 = sh2[None, :].astype(jnp.float32)
    b3 = sh3[None, :].astype(jnp.float32)
    b5 = b5.astype(jnp.float32)

    kernel = functools.partial(_fused_encoder_kernel,
                               w_row=w_row, m2=M2, m3=M3, ksize=k)

    flops = 2 * G * (TB * L1 * K1 * c1p
                     + k * k * M2 * c1p * c2p
                     + k * k * M3 * c2p * c3p
                     + TB * M3 * c3p
                     + TB * c3p * D)
    bytes_accessed = int(
        patches.size * patches.dtype.itemsize + B_pad * D * 4
        + sum(int(a.size) * a.dtype.itemsize
              for a in (w1c, b1, w2c, b2, w3c, b3, pool_mat, w45c, b5)))

    out = pl.pallas_call(
        kernel,
        out_shape=jax.ShapeDtypeStruct((B_pad, D), jnp.float32),
        grid=(G,),
        in_specs=[
            pl.BlockSpec((TB * L1, K1), lambda g: (g, 0)),
            pl.BlockSpec(w1c.shape, lambda g: (0, 0)),
            pl.BlockSpec(b1.shape, lambda g: (0, 0)),
            pl.BlockSpec(w2c.shape, lambda g: (0, 0, 0)),
            pl.BlockSpec(b2.shape, lambda g: (0, 0)),
            pl.BlockSpec(w3c.shape, lambda g: (0, 0, 0)),
            pl.BlockSpec(b3.shape, lambda g: (0, 0)),
            pl.BlockSpec(pool_mat.shape, lambda g: (0, 0)),
            pl.BlockSpec(w45c.shape, lambda g: (0, 0)),
            pl.BlockSpec(b5.shape, lambda g: (0, 0)),
        ],
        out_specs=pl.BlockSpec((TB, D), lambda g: (g, 0)),
        compiler_params=pltpu.CompilerParams(dimension_semantics=("parallel",)),
        cost_estimate=pl.CostEstimate(flops=flops, transcendentals=0,
                                      bytes_accessed=bytes_accessed),
    )(patches, w1c, b1, w2c, b2, w3c, b3, pool_mat, w45c, b5)

    return jnp.squeeze(out[:B])                                   # matches x.squeeze()


# ----------------------------------------------------------------------------
# Pure-JAX reference (correctness check, mirrors the PyTorch module)
# ----------------------------------------------------------------------------
def reference_forward(x_nchw, p):
    def conv(x, w, stride):
        return lax.conv_general_dilated(
            x, w, (stride, stride), "VALID",
            dimension_numbers=("NCHW", "OIHW", "NCHW"),
        )

    def bn(x, b):
        scale = b["gamma"] / jnp.sqrt(b["var"] + BN_EPS)
        shift = b["beta"] - b["mean"] * scale
        return x * scale[None, :, None, None] + shift[None, :, None, None]

    x = jnp.maximum(bn(conv(x_nchw, p["w1"], 2), p["bn1"]), 0.0)
    x = jnp.maximum(bn(conv(x, p["w2"], 1), p["bn2"]), 0.0)
    x = jnp.maximum(bn(conv(x, p["w3"], 1), p["bn3"]), 0.0)
    x = conv(x, p["w4"], 1)
    x = jnp.mean(x, axis=(2, 3), keepdims=True)
    x = conv(x, p["w5"], 1) + p["b5"][None, :, None, None]
    x = jnp.maximum(x, 0.0)
    return jnp.squeeze(x)


# ----------------------------------------------------------------------------
# Deterministic parameter init (shapes follow the nn.Module __init__)
# ----------------------------------------------------------------------------
def init_params(key, in_channel_cnn, out_feature_dim_cnn):
    D = out_feature_dim_cnn
    c1, c2, c3 = D // 4, D // 3, D // 2
    keys = jax.random.split(key, 16)

    def conv_w(k, cout, cin, kh, kw):
        return jax.random.normal(k, (cout, cin, kh, kw), jnp.float32) * 0.1

    def bn_p(k, c):
        k1, k2, k3, k4 = jax.random.split(k, 4)
        return {
            "gamma": 1.0 + 0.1 * jax.random.normal(k1, (c,), jnp.float32),
            "beta": 0.1 * jax.random.normal(k2, (c,), jnp.float32),
            "mean": 0.05 * jax.random.normal(k3, (c,), jnp.float32),
            "var": 1.0 + 0.1 * jax.random.uniform(k4, (c,), jnp.float32),
        }

    return {
        "w1": conv_w(keys[0], c1, in_channel_cnn, 3, 3),
        "bn1": bn_p(keys[1], c1),
        "w2": conv_w(keys[2], c2, c1, 3, 3),
        "bn2": bn_p(keys[3], c2),
        "w3": conv_w(keys[4], c3, c2, 3, 3),
        "bn3": bn_p(keys[5], c3),
        "w4": conv_w(keys[6], D, c3, 1, 1),
        "w5": conv_w(keys[7], D, D, 1, 1),
        "b5": 0.1 * jax.random.normal(keys[8], (D,), jnp.float32),
    }


if __name__ == "__main__":
    key = jax.random.PRNGKey(0)
    k_x, k_p = jax.random.split(key)

    B, in_ch, H, W = 2, 4, 16, 16
    out_dim = 32

    x = jax.random.normal(k_x, (B, in_ch, H, W), jnp.float32)  # NCHW like PyTorch
    params = init_params(k_p, in_ch, out_dim)

    ref = jax.block_until_ready(reference_forward(x, params))

    # Strict check of the fused-kernel scheme with f32 matmul operands.
    out_f32 = jax.block_until_ready(
        raw_csi_encoder_forward(x, params, use_bf16=False))
    np.testing.assert_allclose(np.asarray(out_f32), np.asarray(ref),
                               rtol=1e-4, atol=1e-4)

    # Default performance configuration: bf16 MXU operands, f32 accumulation.
    out = jax.block_until_ready(raw_csi_encoder_forward(x, params))
    assert out.shape == (B, out_dim), out.shape
    np.testing.assert_allclose(np.asarray(out), np.asarray(ref),
                               rtol=5e-2, atol=5e-2)
    print("KERNEL_OK")
</pallas_src>

<mosaic_0001>
module attributes {stable_mosaic.version = 11 : i64} {
  func.func @_fused_encoder_kernel(%arg0: i32, %arg1: memref<112x36xf32, #tpu.memory_space<vmem>>, %arg2: memref<36x8xf32, #tpu.memory_space<vmem>>, %arg3: memref<1x8xf32, #tpu.memory_space<vmem>>, %arg4: memref<9x8x16xf32, #tpu.memory_space<vmem>>, %arg5: memref<1x16xf32, #tpu.memory_space<vmem>>, %arg6: memref<9x16x16xf32, #tpu.memory_space<vmem>>, %arg7: memref<1x16xf32, #tpu.memory_space<vmem>>, %arg8: memref<2x80xf32, #tpu.memory_space<vmem>>, %arg9: memref<16x32xf32, #tpu.memory_space<vmem>>, %arg10: memref<1x32xf32, #tpu.memory_space<vmem>>, %arg11: memref<2x32xf32, #tpu.memory_space<vmem>>) attributes {dimension_semantics = [#tpu.dimension_semantics<parallel>], iteration_bounds = array<i64: 1>, scalar_prefetch = 0 : i64, scratch_operands = 0 : i64, tpu.core_type = #tpu.core_type<tc>, window_params = [{transform_indices = @transform_0, window_bounds = array<i64: 112, 36>}, {pipeline_mode = #tpu.pipeline_mode<synchronous>, transform_indices = @transform_1, window_bounds = array<i64: 36, 8>}, {pipeline_mode = #tpu.pipeline_mode<synchronous>, transform_indices = @transform_2, window_bounds = array<i64: 1, 8>}, {pipeline_mode = #tpu.pipeline_mode<synchronous>, transform_indices = @transform_3, window_bounds = array<i64: 9, 8, 16>}, {pipeline_mode = #tpu.pipeline_mode<synchronous>, transform_indices = @transform_4, window_bounds = array<i64: 1, 16>}, {pipeline_mode = #tpu.pipeline_mode<synchronous>, transform_indices = @transform_5, window_bounds = array<i64: 9, 16, 16>}, {pipeline_mode = #tpu.pipeline_mode<synchronous>, transform_indices = @transform_6, window_bounds = array<i64: 1, 16>}, {pipeline_mode = #tpu.pipeline_mode<synchronous>, transform_indices = @transform_7, window_bounds = array<i64: 2, 80>}, {pipeline_mode = #tpu.pipeline_mode<synchronous>, transform_indices = @transform_8, window_bounds = array<i64: 16, 32>}, {pipeline_mode = #tpu.pipeline_mode<synchronous>, transform_indices = @transform_9, window_bounds = array<i64: 1, 32>}, {transform_indices = @transform_10, window_bounds = array<i64: 2, 32>}]} {
    %c0 = arith.constant 0 : index
    %c0_0 = arith.constant 0 : index
    %0 = vector.load %arg1[%c0, %c0_0] : memref<112x36xf32, #tpu.memory_space<vmem>>, vector<112x36xf32>
    %c0_1 = arith.constant 0 : index
    %c0_2 = arith.constant 0 : index
    %1 = vector.load %arg2[%c0_1, %c0_2] : memref<36x8xf32, #tpu.memory_space<vmem>>, vector<36x8xf32>
    %cst = arith.constant dense<0.000000e+00> : vector<112x8xf32>
    %2 = tpu.matmul %0, %1, %cst {dimension_numbers = #tpu.dot_dimension_numbers<[1], [0], [0], [1], [0, 0, 1, 1], [], []>} : vector<112x36xf32>, vector<36x8xf32>, vector<112x8xf32> -> vector<112x8xf32>
    %c0_3 = arith.constant 0 : index
    %c0_4 = arith.constant 0 : index
    %3 = vector.load %arg3[%c0_3, %c0_4] : memref<1x8xf32, #tpu.memory_space<vmem>>, vector<1x8xf32>
    %4 = vector.broadcast %3 : vector<1x8xf32> to vector<112x8xf32>
    %5 = arith.addf %2, %4 : vector<112x8xf32>
    %cst_5 = arith.constant 0.000000e+00 : f32
    %6 = vector.broadcast %cst_5 : f32 to vector<112x8xf32>
    %7 = arith.maximumf %5, %6 : vector<112x8xf32>
    %8 = vector.extract_strided_slice %7 {offsets = [0, 0], sizes = [96, 8], strides = [1, 1]} : vector<112x8xf32> to vector<96x8xf32>
    %c0_6 = arith.constant 0 : index
    %c0_7 = arith.constant 0 : index
    %c0_8 = arith.constant 0 : index
    %9 = vector.load %arg4[%c0_6, %c0_7, %c0_8] : memref<9x8x16xf32, #tpu.memory_space<vmem>>, vector<1x8x16xf32>
    %10 = vector.shape_cast %9 : vector<1x8x16xf32> to vector<8x16xf32>
    %cst_9 = arith.constant dense<0.000000e+00> : vector<96x16xf32>
    %11 = tpu.matmul %8, %10, %cst_9 {dimension_numbers = #tpu.dot_dimension_numbers<[1], [0], [0], [1], [0, 0, 1, 1], [], []>} : vector<96x8xf32>, vector<8x16xf32>, vector<96x16xf32> -> vector<96x16xf32>
    %12 = vector.extract_strided_slice %7 {offsets = [1, 0], sizes = [96, 8], strides = [1, 1]} : vector<112x8xf32> to vector<96x8xf32>
    %c1 = arith.constant 1 : index
    %c0_10 = arith.constant 0 : index
    %c0_11 = arith.constant 0 : index
    %13 = vector.load %arg4[%c1, %c0_10, %c0_11] : memref<9x8x16xf32, #tpu.memory_space<vmem>>, vector<1x8x16xf32>
    %14 = vector.shape_cast %13 : vector<1x8x16xf32> to vector<8x16xf32>
    %cst_12 = arith.constant dense<0.000000e+00> : vector<96x16xf32>
    %15 = tpu.matmul %12, %14, %cst_12 {dimension_numbers = #tpu.dot_dimension_numbers<[1], [0], [0], [1], [0, 0, 1, 1], [], []>} : vector<96x8xf32>, vector<8x16xf32>, vector<96x16xf32> -> vector<96x16xf32>
    %16 = arith.addf %11, %15 : vector<96x16xf32>
    %17 = vector.extract_strided_slice %7 {offsets = [2, 0], sizes = [96, 8], strides = [1, 1]} : vector<112x8xf32> to vector<96x8xf32>
    %c2 = arith.constant 2 : index
    %c0_13 = arith.constant 0 : index
    %c0_14 = arith.constant 0 : index
    %18 = vector.load %arg4[%c2, %c0_13, %c0_14] : memref<9x8x16xf32, #tpu.memory_space<vmem>>, vector<1x8x16xf32>
    %19 = vector.shape_cast %18 : vector<1x8x16xf32> to vector<8x16xf32>
    %cst_15 = arith.constant dense<0.000000e+00> : vector<96x16xf32>
    %20 = tpu.matmul %17, %19, %cst_15 {dimension_numbers = #tpu.dot_dimension_numbers<[1], [0], [0], [1], [0, 0, 1, 1], [], []>} : vector<96x8xf32>, vector<8x16xf32>, vector<96x16xf32> -> vector<96x16xf32>
    %21 = arith.addf %16, %20 : vector<96x16xf32>
    %22 = vector.extract_strided_slice %7 {offsets = [7, 0], sizes = [96, 8], strides = [1, 1]} : vector<112x8xf32> to vector<96x8xf32>
    %c3 = arith.constant 3 : index
    %c0_16 = arith.constant 0 : index
    %c0_17 = arith.constant 0 : index
    %23 = vector.load %arg4[%c3, %c0_16, %c0_17] : memref<9x8x16xf32, #tpu.memory_space<vmem>>, vector<1x8x16xf32>
    %24 = vector.shape_cast %23 : vector<1x8x16xf32> to vector<8x16xf32>
    %cst_18 = arith.constant dense<0.000000e+00> : vector<96x16xf32>
    %25 = tpu.matmul %22, %24, %cst_18 {dimension_numbers = #tpu.dot_dimension_numbers<[1], [0], [0], [1], [0, 0, 1, 1], [], []>} : vector<96x8xf32>, vector<8x16xf32>, vector<96x16xf32> -> vector<96x16xf32>
    %26 = arith.addf %21, %25 : vector<96x16xf32>
    %27 = vector.extract_strided_slice %7 {offsets = [8, 0], sizes = [96, 8], strides = [1, 1]} : vector<112x8xf32> to vector<96x8xf32>
    %c4 = arith.constant 4 : index
    %c0_19 = arith.constant 0 : index
    %c0_20 = arith.constant 0 : index
    %28 = vector.load %arg4[%c4, %c0_19, %c0_20] : memref<9x8x16xf32, #tpu.memory_space<vmem>>, vector<1x8x16xf32>
    %29 = vector.shape_cast %28 : vector<1x8x16xf32> to vector<8x16xf32>
    %cst_21 = arith.constant dense<0.000000e+00> : vector<96x16xf32>
    %30 = tpu.matmul %27, %29, %cst_21 {dimension_numbers = #tpu.dot_dimension_numbers<[1], [0], [0], [1], [0, 0, 1, 1], [], []>} : vector<96x8xf32>, vector<8x16xf32>, vector<96x16xf32> -> vector<96x16xf32>
    %31 = arith.addf %26, %30 : vector<96x16xf32>
    %32 = vector.extract_strided_slice %7 {offsets = [9, 0], sizes = [96, 8], strides = [1, 1]} : vector<112x8xf32> to vector<96x8xf32>
    %c5 = arith.constant 5 : index
    %c0_22 = arith.constant 0 : index
    %c0_23 = arith.constant 0 : index
    %33 = vector.load %arg4[%c5, %c0_22, %c0_23] : memref<9x8x16xf32, #tpu.memory_space<vmem>>, vector<1x8x16xf32>
    %34 = vector.shape_cast %33 : vector<1x8x16xf32> to vector<8x16xf32>
    %cst_24 = arith.constant dense<0.000000e+00> : vector<96x16xf32>
    %35 = tpu.matmul %32, %34, %cst_24 {dimension_numbers = #tpu.dot_dimension_numbers<[1], [0], [0], [1], [0, 0, 1, 1], [], []>} : vector<96x8xf32>, vector<8x16xf32>, vector<96x16xf32> -> vector<96x16xf32>
    %36 = arith.addf %31, %35 : vector<96x16xf32>
    %37 = vector.extract_strided_slice %7 {offsets = [14, 0], sizes = [96, 8], strides = [1, 1]} : vector<112x8xf32> to vector<96x8xf32>
    %c6 = arith.constant 6 : index
    %c0_25 = arith.constant 0 : index
    %c0_26 = arith.constant 0 : index
    %38 = vector.load %arg4[%c6, %c0_25, %c0_26] : memref<9x8x16xf32, #tpu.memory_space<vmem>>, vector<1x8x16xf32>
    %39 = vector.shape_cast %38 : vector<1x8x16xf32> to vector<8x16xf32>
    %cst_27 = arith.constant dense<0.000000e+00> : vector<96x16xf32>
    %40 = tpu.matmul %37, %39, %cst_27 {dimension_numbers = #tpu.dot_dimension_numbers<[1], [0], [0], [1], [0, 0, 1, 1], [], []>} : vector<96x8xf32>, vector<8x16xf32>, vector<96x16xf32> -> vector<96x16xf32>
    %41 = arith.addf %36, %40 : vector<96x16xf32>
    %42 = vector.extract_strided_slice %7 {offsets = [15, 0], sizes = [96, 8], strides = [1, 1]} : vector<112x8xf32> to vector<96x8xf32>
    %c7 = arith.constant 7 : index
    %c0_28 = arith.constant 0 : index
    %c0_29 = arith.constant 0 : index
    %43 = vector.load %arg4[%c7, %c0_28, %c0_29] : memref<9x8x16xf32, #tpu.memory_space<vmem>>, vector<1x8x16xf32>
    %44 = vector.shape_cast %43 : vector<1x8x16xf32> to vector<8x16xf32>
    %cst_30 = arith.constant dense<0.000000e+00> : vector<96x16xf32>
    %45 = tpu.matmul %42, %44, %cst_30 {dimension_numbers = #tpu.dot_dimension_numbers<[1], [0], [0], [1], [0, 0, 1, 1], [], []>} : vector<96x8xf32>, vector<8x16xf32>, vector<96x16xf32> -> vector<96x16xf32>
    %46 = arith.addf %41, %45 : vector<96x16xf32>
    %47 = vector.extract_strided_slice %7 {offsets = [16, 0], sizes = [96, 8], strides = [1, 1]} : vector<112x8xf32> to vector<96x8xf32>
    %c8 = arith.constant 8 : index
    %c0_31 = arith.constant 0 : index
    %c0_32 = arith.constant 0 : index
    %48 = vector.load %arg4[%c8, %c0_31, %c0_32] : memref<9x8x16xf32, #tpu.memory_space<vmem>>, vector<1x8x16xf32>
    %49 = vector.shape_cast %48 : vector<1x8x16xf32> to vector<8x16xf32>
    %cst_33 = arith.constant dense<0.000000e+00> : vector<96x16xf32>
    %50 = tpu.matmul %47, %49, %cst_33 {dimension_numbers = #tpu.dot_dimension_numbers<[1], [0], [0], [1], [0, 0, 1, 1], [], []>} : vector<96x8xf32>, vector<8x16xf32>, vector<96x16xf32> -> vector<96x16xf32>
    %51 = arith.addf %46, %50 : vector<96x16xf32>
    %c0_34 = arith.constant 0 : index
    %c0_35 = arith.constant 0 : index
    %52 = vector.load %arg5[%c0_34, %c0_35] : memref<1x16xf32, #tpu.memory_space<vmem>>, vector<1x16xf32>
    %53 = vector.broadcast %52 : vector<1x16xf32> to vector<96x16xf32>
    %54 = arith.addf %51, %53 : vector<96x16xf32>
    %cst_36 = arith.constant 0.000000e+00 : f32
    %55 = vector.broadcast %cst_36 : f32 to vector<96x16xf32>
    %56 = arith.maximumf %54, %55 : vector<96x16xf32>
    %57 = vector.extract_strided_slice %56 {offsets = [0, 0], sizes = [80, 16], strides = [1, 1]} : vector<96x16xf32> to vector<80x16xf32>
    %c0_37 = arith.constant 0 : index
    %c0_38 = arith.constant 0 : index
    %c0_39 = arith.constant 0 : index
    %58 = vector.load %arg6[%c0_37, %c0_38, %c0_39] : memref<9x16x16xf32, #tpu.memory_space<vmem>>, vector<1x16x16xf32>
    %59 = vector.shape_cast %58 : vector<1x16x16xf32> to vector<16x16xf32>
    %cst_40 = arith.constant dense<0.000000e+00> : vector<80x16xf32>
    %60 = tpu.matmul %57, %59, %cst_40 {dimension_numbers = #tpu.dot_dimension_numbers<[1], [0], [0], [1], [0, 0, 1, 1], [], []>} : vector<80x16xf32>, vector<16x16xf32>, vector<80x16xf32> -> vector<80x16xf32>
    %61 = vector.extract_strided_slice %56 {offsets = [1, 0], sizes = [80, 16], strides = [1, 1]} : vector<96x16xf32> to vector<80x16xf32>
    %c1_41 = arith.constant 1 : index
    %c0_42 = arith.constant 0 : index
    %c0_43 = arith.constant 0 : index
    %62 = vector.load %arg6[%c1_41, %c0_42, %c0_43] : memref<9x16x16xf32, #tpu.memory_space<vmem>>, vector<1x16x16xf32>
    %63 = vector.shape_cast %62 : vector<1x16x16xf32> to vector<16x16xf32>
    %cst_44 = arith.constant dense<0.000000e+00> : vector<80x16xf32>
    %64 = tpu.matmul %61, %63, %cst_44 {dimension_numbers = #tpu.dot_dimension_numbers<[1], [0], [0], [1], [0, 0, 1, 1], [], []>} : vector<80x16xf32>, vector<16x16xf32>, vector<80x16xf32> -> vector<80x16xf32>
    %65 = arith.addf %60, %64 : vector<80x16xf32>
    %66 = vector.extract_strided_slice %56 {offsets = [2, 0], sizes = [80, 16], strides = [1, 1]} : vector<96x16xf32> to vector<80x16xf32>
    %c2_45 = arith.constant 2 : index
    %c0_46 = arith.constant 0 : index
    %c0_47 = arith.constant 0 : index
    %67 = vector.load %arg6[%c2_45, %c0_46, %c0_47] : memref<9x16x16xf32, #tpu.memory_space<vmem>>, vector<1x16x16xf32>
    %68 = vector.shape_cast %67 : vector<1x16x16xf32> to vector<16x16xf32>
    %cst_48 = arith.constant dense<0.000000e+00> : vector<80x16xf32>
    %69 = tpu.matmul %66, %68, %cst_48 {dimension_numbers = #tpu.dot_dimension_numbers<[1], [0], [0], [1], [0, 0, 1, 1], [], []>} : vector<80x16xf32>, vector<16x16xf32>, vector<80x16xf32> -> vector<80x16xf32>
    %70 = arith.addf %65, %69 : vector<80x16xf32>
    %71 = vector.extract_strided_slice %56 {offsets = [7, 0], sizes = [80, 16], strides = [1, 1]} : vector<96x16xf32> to vector<80x16xf32>
    %c3_49 = arith.constant 3 : index
    %c0_50 = arith.constant 0 : index
    %c0_51 = arith.constant 0 : index
    %72 = vector.load %arg6[%c3_49, %c0_50, %c0_51] : memref<9x16x16xf32, #tpu.memory_space<vmem>>, vector<1x16x16xf32>
    %73 = vector.shape_cast %72 : vector<1x16x16xf32> to vector<16x16xf32>
    %cst_52 = arith.constant dense<0.000000e+00> : vector<80x16xf32>
    %74 = tpu.matmul %71, %73, %cst_52 {dimension_numbers = #tpu.dot_dimension_numbers<[1], [0], [0], [1], [0, 0, 1, 1], [], []>} : vector<80x16xf32>, vector<16x16xf32>, vector<80x16xf32> -> vector<80x16xf32>
    %75 = arith.addf %70, %74 : vector<80x16xf32>
    %76 = vector.extract_strided_slice %56 {offsets = [8, 0], sizes = [80, 16], strides = [1, 1]} : vector<96x16xf32> to vector<80x16xf32>
    %c4_53 = arith.constant 4 : index
    %c0_54 = arith.constant 0 : index
    %c0_55 = arith.constant 0 : index
    %77 = vector.load %arg6[%c4_53, %c0_54, %c0_55] : memref<9x16x16xf32, #tpu.memory_space<vmem>>, vector<1x16x16xf32>
    %78 = vector.shape_cast %77 : vector<1x16x16xf32> to vector<16x16xf32>
    %cst_56 = arith.constant dense<0.000000e+00> : vector<80x16xf32>
    %79 = tpu.matmul %76, %78, %cst_56 {dimension_numbers = #tpu.dot_dimension_numbers<[1], [0], [0], [1], [0, 0, 1, 1], [], []>} : vector<80x16xf32>, vector<16x16xf32>, vector<80x16xf32> -> vector<80x16xf32>
    %80 = arith.addf %75, %79 : vector<80x16xf32>
    %81 = vector.extract_strided_slice %56 {offsets = [9, 0], sizes = [80, 16], strides = [1, 1]} : vector<96x16xf32> to vector<80x16xf32>
    %c5_57 = arith.constant 5 : index
    %c0_58 = arith.constant 0 : index
    %c0_59 = arith.constant 0 : index
    %82 = vector.load %arg6[%c5_57, %c0_58, %c0_59] : memref<9x16x16xf32, #tpu.memory_space<vmem>>, vector<1x16x16xf32>
    %83 = vector.shape_cast %82 : vector<1x16x16xf32> to vector<16x16xf32>
    %cst_60 = arith.constant dense<0.000000e+00> : vector<80x16xf32>
    %84 = tpu.matmul %81, %83, %cst_60 {dimension_numbers = #tpu.dot_dimension_numbers<[1], [0], [0], [1], [0, 0, 1, 1], [], []>} : vector<80x16xf32>, vector<16x16xf32>, vector<80x16xf32> -> vector<80x16xf32>
    %85 = arith.addf %80, %84 : vector<80x16xf32>
    %86 = vector.extract_strided_slice %56 {offsets = [14, 0], sizes = [80, 16], strides = [1, 1]} : vector<96x16xf32> to vector<80x16xf32>
    %c6_61 = arith.constant 6 : index
    %c0_62 = arith.constant 0 : index
    %c0_63 = arith.constant 0 : index
    %87 = vector.load %arg6[%c6_61, %c0_62, %c0_63] : memref<9x16x16xf32, #tpu.memory_space<vmem>>, vector<1x16x16xf32>
    %88 = vector.shape_cast %87 : vector<1x16x16xf32> to vector<16x16xf32>
    %cst_64 = arith.constant dense<0.000000e+00> : vector<80x16xf32>
    %89 = tpu.matmul %86, %88, %cst_64 {dimension_numbers = #tpu.dot_dimension_numbers<[1], [0], [0], [1], [0, 0, 1, 1], [], []>} : vector<80x16xf32>, vector<16x16xf32>, vector<80x16xf32> -> vector<80x16xf32>
    %90 = arith.addf %85, %89 : vector<80x16xf32>
    %91 = vector.extract_strided_slice %56 {offsets = [15, 0], sizes = [80, 16], strides = [1, 1]} : vector<96x16xf32> to vector<80x16xf32>
    %c7_65 = arith.constant 7 : index
    %c0_66 = arith.constant 0 : index
    %c0_67 = arith.constant 0 : index
    %92 = vector.load %arg6[%c7_65, %c0_66, %c0_67] : memref<9x16x16xf32, #tpu.memory_space<vmem>>, vector<1x16x16xf32>
    %93 = vector.shape_cast %92 : vector<1x16x16xf32> to vector<16x16xf32>
    %cst_68 = arith.constant dense<0.000000e+00> : vector<80x16xf32>
    %94 = tpu.matmul %91, %93, %cst_68 {dimension_numbers = #tpu.dot_dimension_numbers<[1], [0], [0], [1], [0, 0, 1, 1], [], []>} : vector<80x16xf32>, vector<16x16xf32>, vector<80x16xf32> -> vector<80x16xf32>
    %95 = arith.addf %90, %94 : vector<80x16xf32>
    %96 = vector.extract_strided_slice %56 {offsets = [16, 0], sizes = [80, 16], strides = [1, 1]} : vector<96x16xf32> to vector<80x16xf32>
    %c8_69 = arith.constant 8 : index
    %c0_70 = arith.constant 0 : index
    %c0_71 = arith.constant 0 : index
    %97 = vector.load %arg6[%c8_69, %c0_70, %c0_71] : memref<9x16x16xf32, #tpu.memory_space<vmem>>, vector<1x16x16xf32>
    %98 = vector.shape_cast %97 : vector<1x16x16xf32> to vector<16x16xf32>
    %cst_72 = arith.constant dense<0.000000e+00> : vector<80x16xf32>
    %99 = tpu.matmul %96, %98, %cst_72 {dimension_numbers = #tpu.dot_dimension_numbers<[1], [0], [0], [1], [0, 0, 1, 1], [], []>} : vector<80x16xf32>, vector<16x16xf32>, vector<80x16xf32> -> vector<80x16xf32>
    %100 = arith.addf %95, %99 : vector<80x16xf32>
    %c0_73 = arith.constant 0 : index
    %c0_74 = arith.constant 0 : index
    %101 = vector.load %arg7[%c0_73, %c0_74] : memref<1x16xf32, #tpu.memory_space<vmem>>, vector<1x16xf32>
    %102 = vector.broadcast %101 : vector<1x16xf32> to vector<80x16xf32>
    %103 = arith.addf %100, %102 : vector<80x16xf32>
    %cst_75 = arith.constant 0.000000e+00 : f32
    %104 = vector.broadcast %cst_75 : f32 to vector<80x16xf32>
    %105 = arith.maximumf %103, %104 : vector<80x16xf32>
    %c0_76 = arith.constant 0 : index
    %c0_77 = arith.constant 0 : index
    %106 = vector.load %arg8[%c0_76, %c0_77] : memref<2x80xf32, #tpu.memory_space<vmem>>, vector<2x80xf32>
    %cst_78 = arith.constant dense<0.000000e+00> : vector<2x16xf32>
    %107 = tpu.matmul %106, %105, %cst_78 {dimension_numbers = #tpu.dot_dimension_numbers<[1], [0], [0], [1], [0, 0, 1, 1], [], []>} : vector<2x80xf32>, vector<80x16xf32>, vector<2x16xf32> -> vector<2x16xf32>
    %c0_79 = arith.constant 0 : index
    %c0_80 = arith.constant 0 : index
    %108 = vector.load %arg9[%c0_79, %c0_80] : memref<16x32xf32, #tpu.memory_space<vmem>>, vector<16x32xf32>
    %cst_81 = arith.constant dense<0.000000e+00> : vector<2x32xf32>
    %109 = tpu.matmul %107, %108, %cst_81 {dimension_numbers = #tpu.dot_dimension_numbers<[1], [0], [0], [1], [0, 0, 1, 1], [], []>} : vector<2x16xf32>, vector<16x32xf32>, vector<2x32xf32> -> vector<2x32xf32>
    %c0_82 = arith.constant 0 : index
    %c0_83 = arith.constant 0 : index
    %110 = vector.load %arg10[%c0_82, %c0_83] : memref<1x32xf32, #tpu.memory_space<vmem>>, vector<1x32xf32>
    %111 = vector.broadcast %110 : vector<1x32xf32> to vector<2x32xf32>
    %112 = arith.addf %109, %111 : vector<2x32xf32>
    %cst_84 = arith.constant 0.000000e+00 : f32
    %113 = vector.broadcast %cst_84 : f32 to vector<2x32xf32>
    %114 = arith.maximumf %112, %113 : vector<2x32xf32>
    %c0_85 = arith.constant 0 : index
    %c0_86 = arith.constant 0 : index
    %115 = vector.load %arg11[%c0_85, %c0_86] : memref<2x32xf32, #tpu.memory_space<vmem>>, vector<2x32xf32>
    tpu.vector_store %arg11[%c0_85, %c0_86], %114 {strides = array<i32>} : memref<2x32xf32, #tpu.memory_space<vmem>>, vector<2x32xf32>,
    return
  }
  func.func @transform_0(%arg0: i32) -> (i32, i32) {
    %c0_i32 = arith.constant 0 : i32
    %c0_i32_0 = arith.constant 0 : i32
    return %arg0, %c0_i32 : i32, i32
  }
  func.func @transform_1(%arg0: i32) -> (i32, i32) {
    %c0_i32 = arith.constant 0 : i32
    %c0_i32_0 = arith.constant 0 : i32
    %c0_i32_1 = arith.constant 0 : i32
    return %c0_i32, %c0_i32_0 : i32, i32
  }
  func.func @transform_2(%arg0: i32) -> (i32, i32) {
    %c0_i32 = arith.constant 0 : i32
    %c0_i32_0 = arith.constant 0 : i32
    %c0_i32_1 = arith.constant 0 : i32
    return %c0_i32, %c0_i32_0 : i32, i32
  }
  func.func @transform_3(%arg0: i32) -> (i32, i32, i32) {
    %c0_i32 = arith.constant 0 : i32
    %c0_i32_0 = arith.constant 0 : i32
    %c0_i32_1 = arith.constant 0 : i32
    %c0_i32_2 = arith.constant 0 : i32
    return %c0_i32, %c0_i32_0, %c0_i32_1 : i32, i32, i32
  }
  func.func @transform_4(%arg0: i32) -> (i32, i32) {
    %c0_i32 = arith.constant 0 : i32
    %c0_i32_0 = arith.constant 0 : i32
    %c0_i32_1 = arith.constant 0 : i32
    return %c0_i32, %c0_i32_0 : i32, i32
  }
  func.func @transform_5(%arg0: i32) -> (i32, i32, i32) {
    %c0_i32 = arith.constant 0 : i32
    %c0_i32_0 = arith.constant 0 : i32
    %c0_i32_1 = arith.constant 0 : i32
    %c0_i32_2 = arith.constant 0 : i32
    return %c0_i32, %c0_i32_0, %c0_i32_1 : i32, i32, i32
  }
  func.func @transform_6(%arg0: i32) -> (i32, i32) {
    %c0_i32 = arith.constant 0 : i32
    %c0_i32_0 = arith.constant 0 : i32
    %c0_i32_1 = arith.constant 0 : i32
    return %c0_i32, %c0_i32_0 : i32, i32
  }
  func.func @transform_7(%arg0: i32) -> (i32, i32) {
    %c0_i32 = arith.constant 0 : i32
    %c0_i32_0 = arith.constant 0 : i32
    %c0_i32_1 = arith.constant 0 : i32
    return %c0_i32, %c0_i32_0 : i32, i32
  }
  func.func @transform_8(%arg0: i32) -> (i32, i32) {
    %c0_i32 = arith.constant 0 : i32
    %c0_i32_0 = arith.constant 0 : i32
    %c0_i32_1 = arith.constant 0 : i32
    return %c0_i32, %c0_i32_0 : i32, i32
  }
  func.func @transform_9(%arg0: i32) -> (i32, i32) {
    %c0_i32 = arith.constant 0 : i32
    %c0_i32_0 = arith.constant 0 : i32
    %c0_i32_1 = arith.constant 0 : i32
    return %c0_i32, %c0_i32_0 : i32, i32
  }
  func.func @transform_10(%arg0: i32) -> (i32, i32) {
    %c0_i32 = arith.constant 0 : i32
    %c0_i32_0 = arith.constant 0 : i32
    return %arg0, %c0_i32 : i32, i32
  }
}

</mosaic_0001>

<llo_original>
// kernel: tpu_custom_call.1
$region0: #{tpu_custom_call.1}
  #allocation0 [shape = 'u32[]', space=smem, size = 0x4, offset = 0x4, fixed_abs, tag = 'smem constant byte address 0x4 - core index']
  #allocation1 [shape = 'u32[72,128]{1,0:T(1,128)}', space=vmem, size = 0x9000, scoped, tag = 'internal scratch']
  %s0 = inlined_call_operand.vmem [shape: f32[112,36], index: 0, kind: input, shape index: {}]
  %s1 = inlined_call_operand.vmem [shape: f32[36,8], index: 1, kind: input, shape index: {}]
  %s2 = inlined_call_operand.vmem [shape: f32[1,8], index: 2, kind: input, shape index: {}]
  %s3 = inlined_call_operand.hbm [shape: f32[9,8,16], index: 3, kind: input, shape index: {}]
  %s4 = inlined_call_operand.vmem [shape: f32[1,16], index: 4, kind: input, shape index: {}]
  %s5 = inlined_call_operand.vmem [shape: f32[9,16,16], index: 5, kind: input, shape index: {}]
  %s6 = inlined_call_operand.vmem [shape: f32[1,16], index: 6, kind: input, shape index: {}]
  %s7 = inlined_call_operand.vmem [shape: f32[2,80], index: 7, kind: input, shape index: {}]
  %s8 = inlined_call_operand.vmem [shape: f32[16,32], index: 8, kind: input, shape index: {}]
  %s9 = inlined_call_operand.vmem [shape: f32[1,32], index: 9, kind: input, shape index: {}]
  %s10 = inlined_call_operand.hbm [shape: f32[2,32], index: 10, kind: output, shape index: {}]
  %s11 = sld [smem:[#allocation0]]
  $region54: #{tpu_custom_call.1} parent=0
    _
  %s13 = ssub.s32 1, %s11
  %s14 = scalar_select 0, %s13, %s11
  $region1: #{tpu_custom_call.1} parent=0
    #allocation2 [shape = 'u8[36864]{0}', space=vmem, size = 0x9000, scoped, tag = 'input window, operand 3, single buffered']
    #allocation3 [shape = 's32[1]{0}', space=sflag, size = 0x4, scoped, tag = 'scoped memory for tpu_custom_call.1']
    #allocation4 [shape = 's32[1]{0}', space=sflag, size = 0x4, scoped, tag = 'scoped memory for tpu_custom_call.1']
    #allocation5 [shape = 'u8[1024]{0}', space=vmem, size = 0x400, scoped, tag = 'output window, operand 0, single buffered']
    %15 = vsyncpa [#allocation3], 0
    %16 = vsyncpa [#allocation4], 0
    // Predicated region
    $region2: #{tpu_custom_call.1} parent=1 // pred_check
      _
    $region3: #{tpu_custom_call.1} parent=1 // pred_check_branch
      %18 = sbr.rel (0) target = $region5
    $region4: #{tpu_custom_call.1} parent=1 // pred_region
      _
    $region5: #{tpu_custom_call.1} parent=1 // pred_fallthru
      _
    // Predicated region
    $region6: #{tpu_custom_call.1} parent=1 // pred_check
      _
    $region7: #{tpu_custom_call.1} parent=1 // pred_check_branch
      %20 = sbr.rel (0) target = $region9
    $region8: #{tpu_custom_call.1} parent=1 // pred_region
      _
    $region9: #{tpu_custom_call.1} parent=1 // pred_fallthru
      _
    // Predicated region
    $region10: #{tpu_custom_call.1} parent=1 // pred_check
      _
    $region11: #{tpu_custom_call.1} parent=1 // pred_check_branch
      %22 = sbr.rel (0) target = $region13
    $region12: #{tpu_custom_call.1} parent=1 // pred_region
      _
    $region13: #{tpu_custom_call.1} parent=1 // pred_fallthru
      _
    // Predicated region
    $region14: #{tpu_custom_call.1} parent=1 // pred_check
      _
    $region15: #{tpu_custom_call.1} parent=1 // pred_check_branch
      %24 = sbr.rel (0) target = $region17
    $region16: #{tpu_custom_call.1} parent=1 // pred_region
      %26 = vsyncadd [#allocation3], 0
      %s27 = sshll.u32 %s3, 4
      %s28 = int_to_ptr.hbm [resolvable:$true] %s27
      %s29 = sshll.u32 [#allocation2], 4
      %s30 = int_to_ptr.vmem [resolvable:$true] %s29
      %35 = dma.hbm_to_vmem [thread:$0]  %s28, 1152, %s30, [#allocation3], 128, 128, 8
    $region17: #{tpu_custom_call.1} parent=1 // pred_fallthru
      _
    // Predicated region
    $region18: #{tpu_custom_call.1} parent=1 // pred_check
      _
    $region19: #{tpu_custom_call.1} parent=1 // pred_check_branch
      %37 = sbr.rel (0) target = $region21
    $region20: #{tpu_custom_call.1} parent=1 // pred_region
      _
    $region21: #{tpu_custom_call.1} parent=1 // pred_fallthru
      _
    // Predicated region
    $region22: #{tpu_custom_call.1} parent=1 // pred_check
      _
    $region23: #{tpu_custom_call.1} parent=1 // pred_check_branch
      %39 = sbr.rel (0) target = $region25
    $region24: #{tpu_custom_call.1} parent=1 // pred_region
      _
    $region25: #{tpu_custom_call.1} parent=1 // pred_fallthru
      _
    // Predicated region
    $region26: #{tpu_custom_call.1} parent=1 // pred_check
      _
    $region27: #{tpu_custom_call.1} parent=1 // pred_check_branch
      %41 = sbr.rel (0) target = $region29
    $region28: #{tpu_custom_call.1} parent=1 // pred_region
      _
    $region29: #{tpu_custom_call.1} parent=1 // pred_fallthru
      _
    // Predicated region
    $region30: #{tpu_custom_call.1} parent=1 // pred_check
      _
    $region31: #{tpu_custom_call.1} parent=1 // pred_check_branch
      %43 = sbr.rel (0) target = $region33
    $region32: #{tpu_custom_call.1} parent=1 // pred_region
      _
    $region33: #{tpu_custom_call.1} parent=1 // pred_fallthru
      _
    // Predicated region
    $region34: #{tpu_custom_call.1} parent=1 // pred_check
      _
    $region35: #{tpu_custom_call.1} parent=1 // pred_check_branch
      %45 = sbr.rel (0) target = $region37
    $region36: #{tpu_custom_call.1} parent=1 // pred_region
      _
    $region37: #{tpu_custom_call.1} parent=1 // pred_fallthru
      _
    // Predicated region
    $region38: #{tpu_custom_call.1} parent=1 // pred_check
      _
    $region39: #{tpu_custom_call.1} parent=1 // pred_check_branch
      %47 = sbr.rel (0) target = $region41
    $region40: #{tpu_custom_call.1} parent=1 // pred_region
      _
    $region41: #{tpu_custom_call.1} parent=1 // pred_fallthru
      _
    // Predicated region
    $region42: #{tpu_custom_call.1} parent=1 // pred_check
      _
    $region43: #{tpu_custom_call.1} parent=1 // pred_check_branch
      %49 = sbr.rel (0) target = $region45
    $region44: #{tpu_custom_call.1} parent=1 // pred_region
      %51 = dma.done [#allocation3], 1152
    $region45: #{tpu_custom_call.1} parent=1 // pred_fallthru
      _
    %v52 = vld [vmem:[%s0] sm:$0xff]
    %v53 = vld [vmem:[%s0 + $0x8] sm:$0xff]
    %v54 = vld [vmem:[%s0 + $0x10] sm:$0xff]
    %v55 = vld [vmem:[%s0 + $0x18] sm:$0xff]
    %v56 = vld [vmem:[%s0 + $0x20] sm:$0xff]
    %v57 = vld [vmem:[%s0 + $0x28] sm:$0xff]
    %v58 = vld [vmem:[%s0 + $0x30] sm:$0xff]
    %v59 = vld [vmem:[%s0 + $0x38] sm:$0xff]
    %v60 = vld [vmem:[%s0 + $0x40] sm:$0xff]
    %v61 = vld [vmem:[%s0 + $0x48] sm:$0xff]
    %v62 = vld [vmem:[%s0 + $0x50] sm:$0xff]
    %v63 = vld [vmem:[%s0 + $0x58] sm:$0xff]
    %v64 = vld [vmem:[%s0 + $0x60] sm:$0xff]
    %v65 = vld [vmem:[%s0 + $0x68] sm:$0xff]
    %v66 = vld [vmem:[%s1] sm:$0xff]
    %v67 = vld [vmem:[%s1 + $0x8] sm:$0xff]
    %v68 = vld [vmem:[%s1 + $0x10] sm:$0xff]
    %v69 = vld [vmem:[%s1 + $0x18] sm:$0xff]
    %v70 = vld [vmem:[%s1 + $0x20] sm:$0xf]
    %v71 = vld [vmem:[%s2] sm:$0x1]
    %v73 = vperm.slane %v71, 0
    %vm75 = vcmask 293888
    %v77 = vsel %vm75, %v52, 0
    %v80 = vsel %vm75, %v53, 0
    %v83 = vsel %vm75, %v54, 0
    %v86 = vsel %vm75, %v55, 0
    %v89 = vsel %vm75, %v56, 0
    %v92 = vsel %vm75, %v57, 0
    %v95 = vsel %vm75, %v58, 0
    %v98 = vsel %vm75, %v59, 0
    %v101 = vsel %vm75, %v60, 0
    %v104 = vsel %vm75, %v61, 0
    %v107 = vsel %vm75, %v62, 0
    %v110 = vsel %vm75, %v63, 0
    %v113 = vsel %vm75, %v64, 0
    %v116 = vsel %vm75, %v65, 0
    %vm118 = vcmask 1043456
    %v120 = vsel %vm118, %v70, 0
    %122 = vmatpush.msra.mxu0 0.0
    %123 = vmatpush.msra.mxu0 0.0
    %124 = vmatpush.msra.mxu0 0.0
    %125 = vmatpush.msra.mxu0 0.0
    %126 = vmatpush.msra.mxu0 0.0
    %127 = vmatpush.msra.mxu0 0.0
    %128 = vmatpush.msra.mxu0 0.0
    %129 = vmatpush.msra.mxu0 0.0
    %130 = vmatpush.msra.mxu0 0.0
    %131 = vmatpush.msra.mxu0 0.0
    %132 = vmatpush.msra.mxu0 0.0
    %133 = vmatpush.msra.mxu0 %v120
    %134 = vmatpush.msra.mxu0 %v69
    %135 = vmatpush.msra.mxu0 %v68
    %136 = vmatpush.msra.mxu0 %v67
    %137 = vmatpush.msra.mxu0 %v66
    %138 = vmatmul.f32.gmra.mxu0 %v77
    %v139 = vpop.f32.mrf.mxu0
    %v140 = vadd.f32 %v73, %v139
    %141 = vmatmul.f32.gmra.mxu0 %v80
    %v142 = vpop.f32.mrf.mxu0
    %v143 = vadd.f32 %v73, %v142
    %144 = vmatmul.f32.gmra.mxu0 %v83
    %v145 = vpop.f32.mrf.mxu0
    %v146 = vadd.f32 %v73, %v145
    %147 = vmatmul.f32.gmra.mxu0 %v86
    %v148 = vpop.f32.mrf.mxu0
    %v149 = vadd.f32 %v73, %v148
    %150 = vmatmul.f32.gmra.mxu0 %v89
    %v151 = vpop.f32.mrf.mxu0
    %v152 = vadd.f32 %v73, %v151
    %153 = vmatmul.f32.gmra.mxu0 %v92
    %v154 = vpop.f32.mrf.mxu0
    %v155 = vadd.f32 %v73, %v154
    %156 = vmatmul.f32.gmra.mxu0 %v95
    %v157 = vpop.f32.mrf.mxu0
    %v158 = vadd.f32 %v73, %v157
    %159 = vmatmul.f32.gmra.mxu0 %v98
    %v160 = vpop.f32.mrf.mxu0
    %v161 = vadd.f32 %v73, %v160
    %162 = vmatmul.f32.gmra.mxu0 %v101
    %v163 = vpop.f32.mrf.mxu0
    %v164 = vadd.f32 %v73, %v163
    %165 = vmatmul.f32.gmra.mxu0 %v104
    %v166 = vpop.f32.mrf.mxu0
    %v167 = vadd.f32 %v73, %v166
    %168 = vmatmul.f32.gmra.mxu0 %v107
    %v169 = vpop.f32.mrf.mxu0
    %v170 = vadd.f32 %v73, %v169
    %171 = vmatmul.f32.gmra.mxu0 %v110
    %v172 = vpop.f32.mrf.mxu0
    %v173 = vadd.f32 %v73, %v172
    %174 = vmatmul.f32.gmra.mxu0 %v113
    %v175 = vpop.f32.mrf.mxu0
    %v176 = vadd.f32 %v73, %v175
    %177 = vmatmul.f32.gmra.mxu0 %v116
    %v178 = vpop.f32.mrf.mxu0
    %v179 = vadd.f32 %v73, %v178
    %180 = vdwg.mxu0
    %v181 = vmax.f32 %v140, 0.0
    %v182 = vmax.f32 %v143, 0.0
    %v183 = vmax.f32 %v146, 0.0
    %v184 = vmax.f32 %v149, 0.0
    %v185 = vmax.f32 %v152, 0.0
    %v186 = vmax.f32 %v155, 0.0
    %v187 = vmax.f32 %v158, 0.0
    %v188 = vmax.f32 %v161, 0.0
    %v189 = vmax.f32 %v164, 0.0
    %v190 = vmax.f32 %v167, 0.0
    %v191 = vmax.f32 %v170, 0.0
    %v192 = vmax.f32 %v173, 0.0
    %v193 = vmax.f32 %v176, 0.0
    %v194 = vmax.f32 %v179, 0.0
    %v195 = vld [vmem:[#allocation2] sm:$0xff]
    %s196 = scalar_lea.vmem [#allocation2], 8
    %v197 = vld [vmem:[%s196] sm:$0xff]
    %vm211 = vcmask 1046528
    %v212 = vrot.slane %v181, 1
    %v213 = vrot.slane %v182, 1
    %v214 = vsel %vm211, %v212, %v213
    %v215 = vrot.slane %v183, 1
    %v216 = vsel %vm211, %v213, %v215
    %v217 = vrot.slane %v184, 1
    %v218 = vsel %vm211, %v215, %v217
    %v219 = vrot.slane %v185, 1
    %v220 = vsel %vm211, %v217, %v219
    %v221 = vrot.slane %v186, 1
    %v222 = vsel %vm211, %v219, %v221
    %v223 = vrot.slane %v187, 1
    %v224 = vsel %vm211, %v221, %v223
    %v225 = vrot.slane %v188, 1
    %v226 = vsel %vm211, %v223, %v225
    %v227 = vrot.slane %v189, 1
    %v228 = vsel %vm211, %v225, %v227
    %v229 = vrot.slane %v190, 1
    %v230 = vsel %vm211, %v227, %v229
    %v231 = vrot.slane %v191, 1
    %v232 = vsel %vm211, %v229, %v231
    %v233 = vrot.slane %v192, 1
    %v234 = vsel %vm211, %v231, %v233
    %v235 = vrot.slane %v193, 1
    %v236 = vsel %vm211, %v233, %v235
    %vm237 = vcmask 64512
    %v238 = vsel %vm237, %v214, 0
    %v240 = vsel %vm237, %v216, 0
    %v242 = vsel %vm237, %v218, 0
    %v244 = vsel %vm237, %v220, 0
    %v246 = vsel %vm237, %v222, 0
    %v248 = vsel %vm237, %v224, 0
    %v250 = vsel %vm237, %v226, 0
    %v252 = vsel %vm237, %v228, 0
    %v254 = vsel %vm237, %v230, 0
    %v256 = vsel %vm237, %v232, 0
    %v258 = vsel %vm237, %v234, 0
    %v260 = vsel %vm237, %v236, 0
    %262 = vmatpush.msra.mxu0 0.0
    %263 = vmatpush.msra.mxu0 0.0
    %264 = vmatpush.msra.mxu0 0.0
    %265 = vmatpush.msra.mxu0 0.0
    %266 = vmatpush.msra.mxu0 0.0
    %267 = vmatpush.msra.mxu0 0.0
    %268 = vmatpush.msra.mxu0 0.0
    %269 = vmatpush.msra.mxu0 0.0
    %270 = vmatpush.msra.mxu0 0.0
    %271 = vmatpush.msra.mxu0 0.0
    %272 = vmatpush.msra.mxu0 0.0
    %273 = vmatpush.msra.mxu0 0.0
    %274 = vmatpush.msra.mxu0 0.0
    %275 = vmatpush.msra.mxu0 0.0
    %276 = vmatpush.msra.mxu0 0.0
    %277 = vmatpush.msra.mxu0 %v197
    %278 = vmatmul.f32.gmra.mxu0 %v238
    %v279 = vpop.f32.mrf.mxu0
    %v280 = vadd.f32 0.0, %v279
    %281 = vmatmul.f32.gmra.mxu0 %v240
    %v282 = vpop.f32.mrf.mxu0
    %v283 = vadd.f32 0.0, %v282
    %284 = vmatmul.f32.gmra.mxu0 %v242
    %v285 = vpop.f32.mrf.mxu0
    %v286 = vadd.f32 0.0, %v285
    %287 = vmatmul.f32.gmra.mxu0 %v244
    %v288 = vpop.f32.mrf.mxu0
    %v289 = vadd.f32 0.0, %v288
    %290 = vmatmul.f32.gmra.mxu0 %v246
    %v291 = vpop.f32.mrf.mxu0
    %v292 = vadd.f32 0.0, %v291
    %293 = vmatmul.f32.gmra.mxu0 %v248
    %v294 = vpop.f32.mrf.mxu0
    %v295 = vadd.f32 0.0, %v294
    %296 = vmatmul.f32.gmra.mxu0 %v250
    %v297 = vpop.f32.mrf.mxu0
    %v298 = vadd.f32 0.0, %v297
    %299 = vmatmul.f32.gmra.mxu0 %v252
    %v300 = vpop.f32.mrf.mxu0
    %v301 = vadd.f32 0.0, %v300
    %302 = vmatmul.f32.gmra.mxu0 %v254
    %v303 = vpop.f32.mrf.mxu0
    %v304 = vadd.f32 0.0, %v303
    %305 = vmatmul.f32.gmra.mxu0 %v256
    %v306 = vpop.f32.mrf.mxu0
    %v307 = vadd.f32 0.0, %v306
    %308 = vmatmul.f32.gmra.mxu0 %v258
    %v309 = vpop.f32.mrf.mxu0
    %v310 = vadd.f32 0.0, %v309
    %311 = vmatmul.f32.gmra.mxu0 %v260
    %v312 = vpop.f32.mrf.mxu0
    %v313 = vadd.f32 0.0, %v312
    %314 = vdwg.mxu0
    %v315 = vsel %vm237, %v181, 0
    %v317 = vsel %vm237, %v182, 0
    %v319 = vsel %vm237, %v183, 0
    %v321 = vsel %vm237, %v184, 0
    %v323 = vsel %vm237, %v185, 0
    %v325 = vsel %vm237, %v186, 0
    %v327 = vsel %vm237, %v187, 0
    %v329 = vsel %vm237, %v188, 0
    %v331 = vsel %vm237, %v189, 0
    %v333 = vsel %vm237, %v190, 0
    %v335 = vsel %vm237, %v191, 0
    %v337 = vsel %vm237, %v192, 0
    %339 = vmatpush.msra.mxu0 0.0
    %340 = vmatpush.msra.mxu0 0.0
    %341 = vmatpush.msra.mxu0 0.0
    %342 = vmatpush.msra.mxu0 0.0
    %343 = vmatpush.msra.mxu0 0.0
    %344 = vmatpush.msra.mxu0 0.0
    %345 = vmatpush.msra.mxu0 0.0
    %346 = vmatpush.msra.mxu0 0.0
    %347 = vmatpush.msra.mxu0 0.0
    %348 = vmatpush.msra.mxu0 0.0
    %349 = vmatpush.msra.mxu0 0.0
    %350 = vmatpush.msra.mxu0 0.0
    %351 = vmatpush.msra.mxu0 0.0
    %352 = vmatpush.msra.mxu0 0.0
    %353 = vmatpush.msra.mxu0 0.0
    %354 = vmatpush.msra.mxu0 %v195
    %355 = vmatmul.f32.gmra.mxu0 %v315
    %v356 = vpop.f32.mrf.mxu0
    %v357 = vadd.f32 %v280, %v356
    %358 = vmatmul.f32.gmra.mxu0 %v317
    %v359 = vpop.f32.mrf.mxu0
    %v360 = vadd.f32 %v283, %v359
    %361 = vmatmul.f32.gmra.mxu0 %v319
    %v362 = vpop.f32.mrf.mxu0
    %v363 = vadd.f32 %v286, %v362
    %364 = vmatmul.f32.gmra.mxu0 %v321
    %v365 = vpop.f32.mrf.mxu0
    %v366 = vadd.f32 %v289, %v365
    %367 = vmatmul.f32.gmra.mxu0 %v323
    %v368 = vpop.f32.mrf.mxu0
    %v369 = vadd.f32 %v292, %v368
    %370 = vmatmul.f32.gmra.mxu0 %v325
    %v371 = vpop.f32.mrf.mxu0
    %v372 = vadd.f32 %v295, %v371
    %373 = vmatmul.f32.gmra.mxu0 %v327
    %v374 = vpop.f32.mrf.mxu0
    %v375 = vadd.f32 %v298, %v374
    %376 = vmatmul.f32.gmra.mxu0 %v329
    %v377 = vpop.f32.mrf.mxu0
    %v378 = vadd.f32 %v301, %v377
    %379 = vmatmul.f32.gmra.mxu0 %v331
    %v380 = vpop.f32.mrf.mxu0
    %v381 = vadd.f32 %v304, %v380
    %382 = vmatmul.f32.gmra.mxu0 %v333
    %v383 = vpop.f32.mrf.mxu0
    %v384 = vadd.f32 %v307, %v383
    %385 = vmatmul.f32.gmra.mxu0 %v335
    %v386 = vpop.f32.mrf.mxu0
    %v387 = vadd.f32 %v310, %v386
    %388 = vmatmul.f32.gmra.mxu0 %v337
    %v389 = vpop.f32.mrf.mxu0
    %v390 = vadd.f32 %v313, %v389
    %391 = vdwg.mxu0
    %s392 = scalar_lea.vmem [#allocation2], 16
    %v393 = vld [vmem:[%s392] sm:$0xff]
    %vm394 = vcmask 1045504
    %v395 = vrot.slane %v181, 2
    %v396 = vrot.slane %v182, 2
    %v397 = vsel %vm394, %v395, %v396
    %v398 = vrot.slane %v183, 2
    %v399 = vsel %vm394, %v396, %v398
    %v400 = vrot.slane %v184, 2
    %v401 = vsel %vm394, %v398, %v400
    %v402 = vrot.slane %v185, 2
    %v403 = vsel %vm394, %v400, %v402
    %v404 = vrot.slane %v186, 2
    %v405 = vsel %vm394, %v402, %v404
    %v406 = vrot.slane %v187, 2
    %v407 = vsel %vm394, %v404, %v406
    %v408 = vrot.slane %v188, 2
    %v409 = vsel %vm394, %v406, %v408
    %v410 = vrot.slane %v189, 2
    %v411 = vsel %vm394, %v408, %v410
    %v412 = vrot.slane %v190, 2
    %v413 = vsel %vm394, %v410, %v412
    %v414 = vrot.slane %v191, 2
    %v415 = vsel %vm394, %v412, %v414
    %v416 = vrot.slane %v192, 2
    %v417 = vsel %vm394, %v414, %v416
    %v418 = vrot.slane %v193, 2
    %v419 = vsel %vm394, %v416, %v418
    %v420 = vsel %vm237, %v397, 0
    %v422 = vsel %vm237, %v399, 0
    %v424 = vsel %vm237, %v401, 0
    %v426 = vsel %vm237, %v403, 0
    %v428 = vsel %vm237, %v405, 0
    %v430 = vsel %vm237, %v407, 0
    %v432 = vsel %vm237, %v409, 0
    %v434 = vsel %vm237, %v411, 0
    %v436 = vsel %vm237, %v413, 0
    %v438 = vsel %vm237, %v415, 0
    %v440 = vsel %vm237, %v417, 0
    %v442 = vsel %vm237, %v419, 0
    %444 = vmatpush.msra.mxu0 0.0
    %445 = vmatpush.msra.mxu0 0.0
    %446 = vmatpush.msra.mxu0 0.0
    %447 = vmatpush.msra.mxu0 0.0
    %448 = vmatpush.msra.mxu0 0.0
    %449 = vmatpush.msra.mxu0 0.0
    %450 = vmatpush.msra.mxu0 0.0
    %451 = vmatpush.msra.mxu0 0.0
    %452 = vmatpush.msra.mxu0 0.0
    %453 = vmatpush.msra.mxu0 0.0
    %454 = vmatpush.msra.mxu0 0.0
    %455 = vmatpush.msra.mxu0 0.0
    %456 = vmatpush.msra.mxu0 0.0
    %457 = vmatpush.msra.mxu0 0.0
    %458 = vmatpush.msra.mxu0 0.0
    %459 = vmatpush.msra.mxu0 %v393
    %460 = vmatmul.f32.gmra.mxu0 %v420
    %v461 = vpop.f32.mrf.mxu0
    %v462 = vadd.f32 0.0, %v461
    %463 = vmatmul.f32.gmra.mxu0 %v422
    %v464 = vpop.f32.mrf.mxu0
    %v465 = vadd.f32 0.0, %v464
    %466 = vmatmul.f32.gmra.mxu0 %v424
    %v467 = vpop.f32.mrf.mxu0
    %v468 = vadd.f32 0.0, %v467
    %469 = vmatmul.f32.gmra.mxu0 %v426
    %v470 = vpop.f32.mrf.mxu0
    %v471 = vadd.f32 0.0, %v470
    %472 = vmatmul.f32.gmra.mxu0 %v428
    %v473 = vpop.f32.mrf.mxu0
    %v474 = vadd.f32 0.0, %v473
    %475 = vmatmul.f32.gmra.mxu0 %v430
    %v476 = vpop.f32.mrf.mxu0
    %v477 = vadd.f32 0.0, %v476
    %478 = vmatmul.f32.gmra.mxu0 %v432
    %v479 = vpop.f32.mrf.mxu0
    %v480 = vadd.f32 0.0, %v479
    %481 = vmatmul.f32.gmra.mxu0 %v434
    %v482 = vpop.f32.mrf.mxu0
    %v483 = vadd.f32 0.0, %v482
    %484 = vmatmul.f32.gmra.mxu0 %v436
    %v485 = vpop.f32.mrf.mxu0
    %v486 = vadd.f32 0.0, %v485
    %487 = vmatmul.f32.gmra.mxu0 %v438
    %v488 = vpop.f32.mrf.mxu0
    %v489 = vadd.f32 0.0, %v488
    %490 = vmatmul.f32.gmra.mxu0 %v440
    %v491 = vpop.f32.mrf.mxu0
    %v492 = vadd.f32 0.0, %v491
    %493 = vmatmul.f32.gmra.mxu0 %v442
    %v494 = vpop.f32.mrf.mxu0
    %v495 = vadd.f32 0.0, %v494
    %496 = vdwg.mxu0
    %v497 = vadd.f32 %v357, %v462
    %v498 = vadd.f32 %v360, %v465
    %v499 = vadd.f32 %v363, %v468
    %v500 = vadd.f32 %v366, %v471
    %v501 = vadd.f32 %v369, %v474
    %v502 = vadd.f32 %v372, %v477
    %v503 = vadd.f32 %v375, %v480
    %v504 = vadd.f32 %v378, %v483
    %v505 = vadd.f32 %v381, %v486
    %v506 = vadd.f32 %v384, %v489
    %v507 = vadd.f32 %v387, %v492
    %v508 = vadd.f32 %v390, %v495
    %s509 = scalar_lea.vmem [#allocation2], 24
    %v510 = vld [vmem:[%s509] sm:$0xff]
    %vm511 = vcmask 1040384
    %v512 = vrot.slane %v181, 7
    %v513 = vrot.slane %v182, 7
    %v514 = vsel %vm511, %v512, %v513
    %v515 = vrot.slane %v183, 7
    %v516 = vsel %vm511, %v513, %v515
    %v517 = vrot.slane %v184, 7
    %v518 = vsel %vm511, %v515, %v517
    %v519 = vrot.slane %v185, 7
    %v520 = vsel %vm511, %v517, %v519
    %v521 = vrot.slane %v186, 7
    %v522 = vsel %vm511, %v519, %v521
    %v523 = vrot.slane %v187, 7
    %v524 = vsel %vm511, %v521, %v523
    %v525 = vrot.slane %v188, 7
    %v526 = vsel %vm511, %v523, %v525
    %v527 = vrot.slane %v189, 7
    %v528 = vsel %vm511, %v525, %v527
    %v529 = vrot.slane %v190, 7
    %v530 = vsel %vm511, %v527, %v529
    %v531 = vrot.slane %v191, 7
    %v532 = vsel %vm511, %v529, %v531
    %v533 = vrot.slane %v192, 7
    %v534 = vsel %vm511, %v531, %v533
    %v535 = vrot.slane %v193, 7
    %v536 = vsel %vm511, %v533, %v535
    %v537 = vsel %vm237, %v514, 0
    %v539 = vsel %vm237, %v516, 0
    %v541 = vsel %vm237, %v518, 0
    %v543 = vsel %vm237, %v520, 0
    %v545 = vsel %vm237, %v522, 0
    %v547 = vsel %vm237, %v524, 0
    %v549 = vsel %vm237, %v526, 0
    %v551 = vsel %vm237, %v528, 0
    %v553 = vsel %vm237, %v530, 0
    %v555 = vsel %vm237, %v532, 0
    %v557 = vsel %vm237, %v534, 0
    %v559 = vsel %vm237, %v536, 0
    %561 = vmatpush.msra.mxu0 0.0
    %562 = vmatpush.msra.mxu0 0.0
    %563 = vmatpush.msra.mxu0 0.0
    %564 = vmatpush.msra.mxu0 0.0
    %565 = vmatpush.msra.mxu0 0.0
    %566 = vmatpush.msra.mxu0 0.0
    %567 = vmatpush.msra.mxu0 0.0
    %568 = vmatpush.msra.mxu0 0.0
    %569 = vmatpush.msra.mxu0 0.0
    %570 = vmatpush.msra.mxu0 0.0
    %571 = vmatpush.msra.mxu0 0.0
    %572 = vmatpush.msra.mxu0 0.0
    %573 = vmatpush.msra.mxu0 0.0
    %574 = vmatpush.msra.mxu0 0.0
    %575 = vmatpush.msra.mxu0 0.0
    %576 = vmatpush.msra.mxu0 %v510
    %577 = vmatmul.f32.gmra.mxu0 %v537
    %v578 = vpop.f32.mrf.mxu0
    %v579 = vadd.f32 0.0, %v578
    %580 = vmatmul.f32.gmra.mxu0 %v539
    %v581 = vpop.f32.mrf.mxu0
    %v582 = vadd.f32 0.0, %v581
    %583 = vmatmul.f32.gmra.mxu0 %v541
    %v584 = vpop.f32.mrf.mxu0
    %v585 = vadd.f32 0.0, %v584
    %586 = vmatmul.f32.gmra.mxu0 %v543
    %v587 = vpop.f32.mrf.mxu0
    %v588 = vadd.f32 0.0, %v587
    %589 = vmatmul.f32.gmra.mxu0 %v545
    %v590 = vpop.f32.mrf.mxu0
    %v591 = vadd.f32 0.0, %v590
    %592 = vmatmul.f32.gmra.mxu0 %v547
    %v593 = vpop.f32.mrf.mxu0
    %v594 = vadd.f32 0.0, %v593
    %595 = vmatmul.f32.gmra.mxu0 %v549
    %v596 = vpop.f32.mrf.mxu0
    %v597 = vadd.f32 0.0, %v596
    %598 = vmatmul.f32.gmra.mxu0 %v551
    %v599 = vpop.f32.mrf.mxu0
    %v600 = vadd.f32 0.0, %v599
    %601 = vmatmul.f32.gmra.mxu0 %v553
    %v602 = vpop.f32.mrf.mxu0
    %v603 = vadd.f32 0.0, %v602
    %604 = vmatmul.f32.gmra.mxu0 %v555
    %v605 = vpop.f32.mrf.mxu0
    %v606 = vadd.f32 0.0, %v605
    %607 = vmatmul.f32.gmra.mxu0 %v557
    %v608 = vpop.f32.mrf.mxu0
    %v609 = vadd.f32 0.0, %v608
    %610 = vmatmul.f32.gmra.mxu0 %v559
    %v611 = vpop.f32.mrf.mxu0
    %v612 = vadd.f32 0.0, %v611
    %613 = vdwg.mxu0
    %v614 = vadd.f32 %v497, %v579
    %v615 = vadd.f32 %v498, %v582
    %v616 = vadd.f32 %v499, %v585
    %v617 = vadd.f32 %v500, %v588
    %v618 = vadd.f32 %v501, %v591
    %v619 = vadd.f32 %v502, %v594
    %v620 = vadd.f32 %v503, %v597
    %v621 = vadd.f32 %v504, %v600
    %v622 = vadd.f32 %v505, %v603
    %v623 = vadd.f32 %v506, %v606
    %v624 = vadd.f32 %v507, %v609
    %v625 = vadd.f32 %v508, %v612
    %s626 = scalar_lea.vmem [#allocation2], 32
    %v627 = vld [vmem:[%s626] sm:$0xff]
    %v628 = vsel %vm237, %v193, 0
    %630 = vmatpush.msra.mxu0 0.0
    %631 = vmatpush.msra.mxu0 0.0
    %632 = vmatpush.msra.mxu0 0.0
    %633 = vmatpush.msra.mxu0 0.0
    %634 = vmatpush.msra.mxu0 0.0
    %635 = vmatpush.msra.mxu0 0.0
    %636 = vmatpush.msra.mxu0 0.0
    %637 = vmatpush.msra.mxu0 0.0
    %638 = vmatpush.msra.mxu0 0.0
    %639 = vmatpush.msra.mxu0 0.0
    %640 = vmatpush.msra.mxu0 0.0
    %641 = vmatpush.msra.mxu0 0.0
    %642 = vmatpush.msra.mxu0 0.0
    %643 = vmatpush.msra.mxu0 0.0
    %644 = vmatpush.msra.mxu0 0.0
    %645 = vmatpush.msra.mxu0 %v627
    %646 = vmatmul.f32.gmra.mxu0 %v317
    %v647 = vpop.f32.mrf.mxu0
    %v648 = vadd.f32 0.0, %v647
    %649 = vmatmul.f32.gmra.mxu0 %v319
    %v650 = vpop.f32.mrf.mxu0
    %v651 = vadd.f32 0.0, %v650
    %652 = vmatmul.f32.gmra.mxu0 %v321
    %v653 = vpop.f32.mrf.mxu0
    %v654 = vadd.f32 0.0, %v653
    %655 = vmatmul.f32.gmra.mxu0 %v323
    %v656 = vpop.f32.mrf.mxu0
    %v657 = vadd.f32 0.0, %v656
    %658 = vmatmul.f32.gmra.mxu0 %v325
    %v659 = vpop.f32.mrf.mxu0
    %v660 = vadd.f32 0.0, %v659
    %661 = vmatmul.f32.gmra.mxu0 %v327
    %v662 = vpop.f32.mrf.mxu0
    %v663 = vadd.f32 0.0, %v662
    %664 = vmatmul.f32.gmra.mxu0 %v329
    %v665 = vpop.f32.mrf.mxu0
    %v666 = vadd.f32 0.0, %v665
    %667 = vmatmul.f32.gmra.mxu0 %v331
    %v668 = vpop.f32.mrf.mxu0
    %v669 = vadd.f32 0.0, %v668
    %670 = vmatmul.f32.gmra.mxu0 %v333
    %v671 = vpop.f32.mrf.mxu0
    %v672 = vadd.f32 0.0, %v671
    %673 = vmatmul.f32.gmra.mxu0 %v335
    %v674 = vpop.f32.mrf.mxu0
    %v675 = vadd.f32 0.0, %v674
    %676 = vmatmul.f32.gmra.mxu0 %v337
    %v677 = vpop.f32.mrf.mxu0
    %v678 = vadd.f32 0.0, %v677
    %679 = vmatmul.f32.gmra.mxu0 %v628
    %v680 = vpop.f32.mrf.mxu0
    %v681 = vadd.f32 0.0, %v680
    %682 = vdwg.mxu0
    %v683 = vadd.f32 %v614, %v648
    %v684 = vadd.f32 %v615, %v651
    %v685 = vadd.f32 %v616, %v654
    %v686 = vadd.f32 %v617, %v657
    %v687 = vadd.f32 %v618, %v660
    %v688 = vadd.f32 %v619, %v663
    %v689 = vadd.f32 %v620, %v666
    %v690 = vadd.f32 %v621, %v669
    %v691 = vadd.f32 %v622, %v672
    %v692 = vadd.f32 %v623, %v675
    %v693 = vadd.f32 %v624, %v678
    %v694 = vadd.f32 %v625, %v681
    %s695 = scalar_lea.vmem [#allocation2], 40
    %v696 = vld [vmem:[%s695] sm:$0xff]
    %v698 = vrot.slane %v194, 1
    %v699 = vsel %vm211, %v235, %v698
    %v700 = vsel %vm237, %v699, 0
    %702 = vmatpush.msra.mxu0 0.0
    %703 = vmatpush.msra.mxu0 0.0
    %704 = vmatpush.msra.mxu0 0.0
    %705 = vmatpush.msra.mxu0 0.0
    %706 = vmatpush.msra.mxu0 0.0
    %707 = vmatpush.msra.mxu0 0.0
    %708 = vmatpush.msra.mxu0 0.0
    %709 = vmatpush.msra.mxu0 0.0
    %710 = vmatpush.msra.mxu0 0.0
    %711 = vmatpush.msra.mxu0 0.0
    %712 = vmatpush.msra.mxu0 0.0
    %713 = vmatpush.msra.mxu0 0.0
    %714 = vmatpush.msra.mxu0 0.0
    %715 = vmatpush.msra.mxu0 0.0
    %716 = vmatpush.msra.mxu0 0.0
    %717 = vmatpush.msra.mxu0 %v696
    %718 = vmatmul.f32.gmra.mxu0 %v240
    %v719 = vpop.f32.mrf.mxu0
    %v720 = vadd.f32 0.0, %v719
    %721 = vmatmul.f32.gmra.mxu0 %v242
    %v722 = vpop.f32.mrf.mxu0
    %v723 = vadd.f32 0.0, %v722
    %724 = vmatmul.f32.gmra.mxu0 %v244
    %v725 = vpop.f32.mrf.mxu0
    %v726 = vadd.f32 0.0, %v725
    %727 = vmatmul.f32.gmra.mxu0 %v246
    %v728 = vpop.f32.mrf.mxu0
    %v729 = vadd.f32 0.0, %v728
    %730 = vmatmul.f32.gmra.mxu0 %v248
    %v731 = vpop.f32.mrf.mxu0
    %v732 = vadd.f32 0.0, %v731
    %733 = vmatmul.f32.gmra.mxu0 %v250
    %v734 = vpop.f32.mrf.mxu0
    %v735 = vadd.f32 0.0, %v734
    %736 = vmatmul.f32.gmra.mxu0 %v252
    %v737 = vpop.f32.mrf.mxu0
    %v738 = vadd.f32 0.0, %v737
    %739 = vmatmul.f32.gmra.mxu0 %v254
    %v740 = vpop.f32.mrf.mxu0
    %v741 = vadd.f32 0.0, %v740
    %742 = vmatmul.f32.gmra.mxu0 %v256
    %v743 = vpop.f32.mrf.mxu0
    %v744 = vadd.f32 0.0, %v743
    %745 = vmatmul.f32.gmra.mxu0 %v258
    %v746 = vpop.f32.mrf.mxu0
    %v747 = vadd.f32 0.0, %v746
    %748 = vmatmul.f32.gmra.mxu0 %v260
    %v749 = vpop.f32.mrf.mxu0
    %v750 = vadd.f32 0.0, %v749
    %751 = vmatmul.f32.gmra.mxu0 %v700
    %v752 = vpop.f32.mrf.mxu0
    %v753 = vadd.f32 0.0, %v752
    %754 = vdwg.mxu0
    %v755 = vadd.f32 %v683, %v720
    %v756 = vadd.f32 %v684, %v723
    %v757 = vadd.f32 %v685, %v726
    %v758 = vadd.f32 %v686, %v729
    %v759 = vadd.f32 %v687, %v732
    %v760 = vadd.f32 %v688, %v735
    %v761 = vadd.f32 %v689, %v738
    %v762 = vadd.f32 %v690, %v741
    %v763 = vadd.f32 %v691, %v744
    %v764 = vadd.f32 %v692, %v747
    %v765 = vadd.f32 %v693, %v750
    %v766 = vadd.f32 %v694, %v753
    %s767 = scalar_lea.vmem [#allocation2], 48
    %v768 = vld [vmem:[%s767] sm:$0xff]
    %vm769 = vcmask 1041408
    %v770 = vrot.slane %v182, 6
    %v771 = vrot.slane %v183, 6
    %v772 = vsel %vm769, %v770, %v771
    %v773 = vrot.slane %v184, 6
    %v774 = vsel %vm769, %v771, %v773
    %v775 = vrot.slane %v185, 6
    %v776 = vsel %vm769, %v773, %v775
    %v777 = vrot.slane %v186, 6
    %v778 = vsel %vm769, %v775, %v777
    %v779 = vrot.slane %v187, 6
    %v780 = vsel %vm769, %v777, %v779
    %v781 = vrot.slane %v188, 6
    %v782 = vsel %vm769, %v779, %v781
    %v783 = vrot.slane %v189, 6
    %v784 = vsel %vm769, %v781, %v783
    %v785 = vrot.slane %v190, 6
    %v786 = vsel %vm769, %v783, %v785
    %v787 = vrot.slane %v191, 6
    %v788 = vsel %vm769, %v785, %v787
    %v789 = vrot.slane %v192, 6
    %v790 = vsel %vm769, %v787, %v789
    %v791 = vrot.slane %v193, 6
    %v792 = vsel %vm769, %v789, %v791
    %v793 = vrot.slane %v194, 6
    %v794 = vsel %vm769, %v791, %v793
    %v795 = vsel %vm237, %v772, 0
    %v797 = vsel %vm237, %v774, 0
    %v799 = vsel %vm237, %v776, 0
    %v801 = vsel %vm237, %v778, 0
    %v803 = vsel %vm237, %v780, 0
    %v805 = vsel %vm237, %v782, 0
    %v807 = vsel %vm237, %v784, 0
    %v809 = vsel %vm237, %v786, 0
    %v811 = vsel %vm237, %v788, 0
    %v813 = vsel %vm237, %v790, 0
    %v815 = vsel %vm237, %v792, 0
    %v817 = vsel %vm237, %v794, 0
    %819 = vmatpush.msra.mxu0 0.0
    %820 = vmatpush.msra.mxu0 0.0
    %821 = vmatpush.msra.mxu0 0.0
    %822 = vmatpush.msra.mxu0 0.0
    %823 = vmatpush.msra.mxu0 0.0
    %824 = vmatpush.msra.mxu0 0.0
    %825 = vmatpush.msra.mxu0 0.0
    %826 = vmatpush.msra.mxu0 0.0
    %827 = vmatpush.msra.mxu0 0.0
    %828 = vmatpush.msra.mxu0 0.0
    %829 = vmatpush.msra.mxu0 0.0
    %830 = vmatpush.msra.mxu0 0.0
    %831 = vmatpush.msra.mxu0 0.0
    %832 = vmatpush.msra.mxu0 0.0
    %833 = vmatpush.msra.mxu0 0.0
    %834 = vmatpush.msra.mxu0 %v768
    %835 = vmatmul.f32.gmra.mxu0 %v795
    %v836 = vpop.f32.mrf.mxu0
    %v837 = vadd.f32 0.0, %v836
    %838 = vmatmul.f32.gmra.mxu0 %v797
    %v839 = vpop.f32.mrf.mxu0
    %v840 = vadd.f32 0.0, %v839
    %841 = vmatmul.f32.gmra.mxu0 %v799
    %v842 = vpop.f32.mrf.mxu0
    %v843 = vadd.f32 0.0, %v842
    %844 = vmatmul.f32.gmra.mxu0 %v801
    %v845 = vpop.f32.mrf.mxu0
    %v846 = vadd.f32 0.0, %v845
    %847 = vmatmul.f32.gmra.mxu0 %v803
    %v848 = vpop.f32.mrf.mxu0
    %v849 = vadd.f32 0.0, %v848
    %850 = vmatmul.f32.gmra.mxu0 %v805
    %v851 = vpop.f32.mrf.mxu0
    %v852 = vadd.f32 0.0, %v851
    %853 = vmatmul.f32.gmra.mxu0 %v807
    %v854 = vpop.f32.mrf.mxu0
    %v855 = vadd.f32 0.0, %v854
    %856 = vmatmul.f32.gmra.mxu0 %v809
    %v857 = vpop.f32.mrf.mxu0
    %v858 = vadd.f32 0.0, %v857
    %859 = vmatmul.f32.gmra.mxu0 %v811
    %v860 = vpop.f32.mrf.mxu0
    %v861 = vadd.f32 0.0, %v860
    %862 = vmatmul.f32.gmra.mxu0 %v813
    %v863 = vpop.f32.mrf.mxu0
    %v864 = vadd.f32 0.0, %v863
    %865 = vmatmul.f32.gmra.mxu0 %v815
    %v866 = vpop.f32.mrf.mxu0
    %v867 = vadd.f32 0.0, %v866
    %868 = vmatmul.f32.gmra.mxu0 %v817
    %v869 = vpop.f32.mrf.mxu0
    %v870 = vadd.f32 0.0, %v869
    %871 = vdwg.mxu0
    %v872 = vadd.f32 %v755, %v837
    %v873 = vadd.f32 %v756, %v840
    %v874 = vadd.f32 %v757, %v843
    %v875 = vadd.f32 %v758, %v846
    %v876 = vadd.f32 %v759, %v849
    %v877 = vadd.f32 %v760, %v852
    %v878 = vadd.f32 %v761, %v855
    %v879 = vadd.f32 %v762, %v858
    %v880 = vadd.f32 %v763, %v861
    %v881 = vadd.f32 %v764, %v864
    %v882 = vadd.f32 %v765, %v867
    %v883 = vadd.f32 %v766, %v870
    %s884 = scalar_lea.vmem [#allocation2], 56
    %v885 = vld [vmem:[%s884] sm:$0xff]
    %v886 = vrot.slane %v194, 7
    %v887 = vsel %vm511, %v535, %v886
    %v888 = vsel %vm237, %v887, 0
    %890 = vmatpush.msra.mxu0 0.0
    %891 = vmatpush.msra.mxu0 0.0
    %892 = vmatpush.msra.mxu0 0.0
    %893 = vmatpush.msra.mxu0 0.0
    %894 = vmatpush.msra.mxu0 0.0
    %895 = vmatpush.msra.mxu0 0.0
    %896 = vmatpush.msra.mxu0 0.0
    %897 = vmatpush.msra.mxu0 0.0
    %898 = vmatpush.msra.mxu0 0.0
    %899 = vmatpush.msra.mxu0 0.0
    %900 = vmatpush.msra.mxu0 0.0
    %901 = vmatpush.msra.mxu0 0.0
    %902 = vmatpush.msra.mxu0 0.0
    %903 = vmatpush.msra.mxu0 0.0
    %904 = vmatpush.msra.mxu0 0.0
    %905 = vmatpush.msra.mxu0 %v885
    %906 = vmatmul.f32.gmra.mxu0 %v539
    %v907 = vpop.f32.mrf.mxu0
    %v908 = vadd.f32 0.0, %v907
    %909 = vmatmul.f32.gmra.mxu0 %v541
    %v910 = vpop.f32.mrf.mxu0
    %v911 = vadd.f32 0.0, %v910
    %912 = vmatmul.f32.gmra.mxu0 %v543
    %v913 = vpop.f32.mrf.mxu0
    %v914 = vadd.f32 0.0, %v913
    %915 = vmatmul.f32.gmra.mxu0 %v545
    %v916 = vpop.f32.mrf.mxu0
    %v917 = vadd.f32 0.0, %v916
    %918 = vmatmul.f32.gmra.mxu0 %v547
    %v919 = vpop.f32.mrf.mxu0
    %v920 = vadd.f32 0.0, %v919
    %921 = vmatmul.f32.gmra.mxu0 %v549
    %v922 = vpop.f32.mrf.mxu0
    %v923 = vadd.f32 0.0, %v922
    %924 = vmatmul.f32.gmra.mxu0 %v551
    %v925 = vpop.f32.mrf.mxu0
    %v926 = vadd.f32 0.0, %v925
    %927 = vmatmul.f32.gmra.mxu0 %v553
    %v928 = vpop.f32.mrf.mxu0
    %v929 = vadd.f32 0.0, %v928
    %930 = vmatmul.f32.gmra.mxu0 %v555
    %v931 = vpop.f32.mrf.mxu0
    %v932 = vadd.f32 0.0, %v931
    %933 = vmatmul.f32.gmra.mxu0 %v557
    %v934 = vpop.f32.mrf.mxu0
    %v935 = vadd.f32 0.0, %v934
    %936 = vmatmul.f32.gmra.mxu0 %v559
    %v937 = vpop.f32.mrf.mxu0
    %v938 = vadd.f32 0.0, %v937
    %939 = vmatmul.f32.gmra.mxu0 %v888
    %v940 = vpop.f32.mrf.mxu0
    %v941 = vadd.f32 0.0, %v940
    %942 = vdwg.mxu0
    %v943 = vadd.f32 %v872, %v908
    %v944 = vadd.f32 %v873, %v911
    %v945 = vadd.f32 %v874, %v914
    %v946 = vadd.f32 %v875, %v917
    %v947 = vadd.f32 %v876, %v920
    %v948 = vadd.f32 %v877, %v923
    %v949 = vadd.f32 %v878, %v926
    %v950 = vadd.f32 %v879, %v929
    %v951 = vadd.f32 %v880, %v932
    %v952 = vadd.f32 %v881, %v935
    %v953 = vadd.f32 %v882, %v938
    %v954 = vadd.f32 %v883, %v941
    %s955 = scalar_lea.vmem [#allocation2], 64
    %v956 = vld [vmem:[%s955] sm:$0xff]
    %v957 = vsel %vm237, %v194, 0
    %959 = vmatpush.msra.mxu0 0.0
    %960 = vmatpush.msra.mxu0 0.0
    %961 = vmatpush.msra.mxu0 0.0
    %962 = vmatpush.msra.mxu0 0.0
    %963 = vmatpush.msra.mxu0 0.0
    %964 = vmatpush.msra.mxu0 0.0
    %965 = vmatpush.msra.mxu0 0.0
    %966 = vmatpush.msra.mxu0 0.0
    %967 = vmatpush.msra.mxu0 0.0
    %968 = vmatpush.msra.mxu0 0.0
    %969 = vmatpush.msra.mxu0 0.0
    %970 = vmatpush.msra.mxu0 0.0
    %971 = vmatpush.msra.mxu0 0.0
    %972 = vmatpush.msra.mxu0 0.0
    %973 = vmatpush.msra.mxu0 0.0
    %974 = vmatpush.msra.mxu0 %v956
    %975 = vmatmul.f32.gmra.mxu0 %v319
    %v976 = vpop.f32.mrf.mxu0
    %v977 = vadd.f32 0.0, %v976
    %978 = vmatmul.f32.gmra.mxu0 %v321
    %v979 = vpop.f32.mrf.mxu0
    %v980 = vadd.f32 0.0, %v979
    %981 = vmatmul.f32.gmra.mxu0 %v323
    %v982 = vpop.f32.mrf.mxu0
    %v983 = vadd.f32 0.0, %v982
    %984 = vmatmul.f32.gmra.mxu0 %v325
    %v985 = vpop.f32.mrf.mxu0
    %v986 = vadd.f32 0.0, %v985
    %987 = vmatmul.f32.gmra.mxu0 %v327
    %v988 = vpop.f32.mrf.mxu0
    %v989 = vadd.f32 0.0, %v988
    %990 = vmatmul.f32.gmra.mxu0 %v329
    %v991 = vpop.f32.mrf.mxu0
    %v992 = vadd.f32 0.0, %v991
    %993 = vmatmul.f32.gmra.mxu0 %v331
    %v994 = vpop.f32.mrf.mxu0
    %v995 = vadd.f32 0.0, %v994
    %996 = vmatmul.f32.gmra.mxu0 %v333
    %v997 = vpop.f32.mrf.mxu0
    %v998 = vadd.f32 0.0, %v997
    %999 = vmatmul.f32.gmra.mxu0 %v335
    %v1000 = vpop.f32.mrf.mxu0
    %v1001 = vadd.f32 0.0, %v1000
    %1002 = vmatmul.f32.gmra.mxu0 %v337
    %v1003 = vpop.f32.mrf.mxu0
    %v1004 = vadd.f32 0.0, %v1003
    %1005 = vmatmul.f32.gmra.mxu0 %v628
    %v1006 = vpop.f32.mrf.mxu0
    %v1007 = vadd.f32 0.0, %v1006
    %1008 = vmatmul.f32.gmra.mxu0 %v957
    %v1009 = vpop.f32.mrf.mxu0
    %v1010 = vadd.f32 0.0, %v1009
    %1011 = vdwg.mxu0
    %v1012 = vadd.f32 %v943, %v977
    %v1013 = vadd.f32 %v944, %v980
    %v1014 = vadd.f32 %v945, %v983
    %v1015 = vadd.f32 %v946, %v986
    %v1016 = vadd.f32 %v947, %v989
    %v1017 = vadd.f32 %v948, %v992
    %v1018 = vadd.f32 %v949, %v995
    %v1019 = vadd.f32 %v950, %v998
    %v1020 = vadd.f32 %v951, %v1001
    %v1021 = vadd.f32 %v952, %v1004
    %v1022 = vadd.f32 %v953, %v1007
    %v1023 = vadd.f32 %v954, %v1010
    %v1024 = vld [vmem:[%s4] sm:$0x1]
    %v1026 = vperm.slane %v1024, 0
    %v1028 = vadd.f32 %v1012, %v1026
    %v1029 = vadd.f32 %v1013, %v1026
    %v1030 = vadd.f32 %v1014, %v1026
    %v1031 = vadd.f32 %v1015, %v1026
    %v1032 = vadd.f32 %v1016, %v1026
    %v1033 = vadd.f32 %v1017, %v1026
    %v1034 = vadd.f32 %v1018, %v1026
    %v1035 = vadd.f32 %v1019, %v1026
    %v1036 = vadd.f32 %v1020, %v1026
    %v1037 = vadd.f32 %v1021, %v1026
    %v1038 = vadd.f32 %v1022, %v1026
    %v1039 = vadd.f32 %v1023, %v1026
    %v1040 = vmax.f32 %v1028, 0.0
    %v1041 = vmax.f32 %v1029, 0.0
    %v1042 = vmax.f32 %v1030, 0.0
    %v1043 = vmax.f32 %v1031, 0.0
    %v1044 = vmax.f32 %v1032, 0.0
    %v1045 = vmax.f32 %v1033, 0.0
    %v1046 = vmax.f32 %v1034, 0.0
    %v1047 = vmax.f32 %v1035, 0.0
    %v1048 = vmax.f32 %v1036, 0.0
    %v1049 = vmax.f32 %v1037, 0.0
    %v1050 = vmax.f32 %v1038, 0.0
    %v1051 = vmax.f32 %v1039, 0.0
    %v1052 = vld [vmem:[%s5] sm:$0xff]
    %v1053 = vld [vmem:[%s5 + $0x8] sm:$0xff]
    %s1054 = scalar_lea.vmem %s5, 16
    %v1055 = vld [vmem:[%s1054] sm:$0xff]
    %v1056 = vld [vmem:[%s1054 + $0x8] sm:$0xff]
    %v1068 = vrot.slane %v1040, 1
    %v1069 = vrot.slane %v1041, 1
    %v1070 = vsel %vm211, %v1068, %v1069
    %v1071 = vrot.slane %v1042, 1
    %v1072 = vsel %vm211, %v1069, %v1071
    %v1073 = vrot.slane %v1043, 1
    %v1074 = vsel %vm211, %v1071, %v1073
    %v1075 = vrot.slane %v1044, 1
    %v1076 = vsel %vm211, %v1073, %v1075
    %v1077 = vrot.slane %v1045, 1
    %v1078 = vsel %vm211, %v1075, %v1077
    %v1079 = vrot.slane %v1046, 1
    %v1080 = vsel %vm211, %v1077, %v1079
    %v1081 = vrot.slane %v1047, 1
    %v1082 = vsel %vm211, %v1079, %v1081
    %v1083 = vrot.slane %v1048, 1
    %v1084 = vsel %vm211, %v1081, %v1083
    %v1085 = vrot.slane %v1049, 1
    %v1086 = vsel %vm211, %v1083, %v1085
    %v1087 = vrot.slane %v1050, 1
    %v1088 = vsel %vm211, %v1085, %v1087
    %vm1089 = vcmask 130048
    %v1090 = vsel %vm1089, %v1070, 0
    %v1092 = vsel %vm1089, %v1072, 0
    %v1094 = vsel %vm1089, %v1074, 0
    %v1096 = vsel %vm1089, %v1076, 0
    %v1098 = vsel %vm1089, %v1078, 0
    %v1100 = vsel %vm1089, %v1080, 0
    %v1102 = vsel %vm1089, %v1082, 0
    %v1104 = vsel %vm1089, %v1084, 0
    %v1106 = vsel %vm1089, %v1086, 0
    %v1108 = vsel %vm1089, %v1088, 0
    %1110 = vmatpush.msra.mxu0 0.0
    %1111 = vmatpush.msra.mxu0 0.0
    %1112 = vmatpush.msra.mxu0 0.0
    %1113 = vmatpush.msra.mxu0 0.0
    %1114 = vmatpush.msra.mxu0 0.0
    %1115 = vmatpush.msra.mxu0 0.0
    %1116 = vmatpush.msra.mxu0 0.0
    %1117 = vmatpush.msra.mxu0 0.0
    %1118 = vmatpush.msra.mxu0 0.0
    %1119 = vmatpush.msra.mxu0 0.0
    %1120 = vmatpush.msra.mxu0 0.0
    %1121 = vmatpush.msra.mxu0 0.0
    %1122 = vmatpush.msra.mxu0 0.0
    %1123 = vmatpush.msra.mxu0 0.0
    %1124 = vmatpush.msra.mxu0 %v1056
    %1125 = vmatpush.msra.mxu0 %v1055
    %1126 = vmatmul.f32.gmra.mxu0 %v1090
    %v1127 = vpop.f32.mrf.mxu0
    %v1128 = vadd.f32 0.0, %v1127
    %1129 = vmatmul.f32.gmra.mxu0 %v1092
    %v1130 = vpop.f32.mrf.mxu0
    %v1131 = vadd.f32 0.0, %v1130
    %1132 = vmatmul.f32.gmra.mxu0 %v1094
    %v1133 = vpop.f32.mrf.mxu0
    %v1134 = vadd.f32 0.0, %v1133
    %1135 = vmatmul.f32.gmra.mxu0 %v1096
    %v1136 = vpop.f32.mrf.mxu0
    %v1137 = vadd.f32 0.0, %v1136
    %1138 = vmatmul.f32.gmra.mxu0 %v1098
    %v1139 = vpop.f32.mrf.mxu0
    %v1140 = vadd.f32 0.0, %v1139
    %1141 = vmatmul.f32.gmra.mxu0 %v1100
    %v1142 = vpop.f32.mrf.mxu0
    %v1143 = vadd.f32 0.0, %v1142
    %1144 = vmatmul.f32.gmra.mxu0 %v1102
    %v1145 = vpop.f32.mrf.mxu0
    %v1146 = vadd.f32 0.0, %v1145
    %1147 = vmatmul.f32.gmra.mxu0 %v1104
    %v1148 = vpop.f32.mrf.mxu0
    %v1149 = vadd.f32 0.0, %v1148
    %1150 = vmatmul.f32.gmra.mxu0 %v1106
    %v1151 = vpop.f32.mrf.mxu0
    %v1152 = vadd.f32 0.0, %v1151
    %1153 = vmatmul.f32.gmra.mxu0 %v1108
    %v1154 = vpop.f32.mrf.mxu0
    %v1155 = vadd.f32 0.0, %v1154
    %1156 = vdwg.mxu0
    %v1157 = vsel %vm1089, %v1040, 0
    %v1159 = vsel %vm1089, %v1041, 0
    %v1161 = vsel %vm1089, %v1042, 0
    %v1163 = vsel %vm1089, %v1043, 0
    %v1165 = vsel %vm1089, %v1044, 0
    %v1167 = vsel %vm1089, %v1045, 0
    %v1169 = vsel %vm1089, %v1046, 0
    %v1171 = vsel %vm1089, %v1047, 0
    %v1173 = vsel %vm1089, %v1048, 0
    %v1175 = vsel %vm1089, %v1049, 0
    %1177 = vmatpush.msra.mxu0 0.0
    %1178 = vmatpush.msra.mxu0 0.0
    %1179 = vmatpush.msra.mxu0 0.0
    %1180 = vmatpush.msra.mxu0 0.0
    %1181 = vmatpush.msra.mxu0 0.0
    %1182 = vmatpush.msra.mxu0 0.0
    %1183 = vmatpush.msra.mxu0 0.0
    %1184 = vmatpush.msra.mxu0 0.0
    %1185 = vmatpush.msra.mxu0 0.0
    %1186 = vmatpush.msra.mxu0 0.0
    %1187 = vmatpush.msra.mxu0 0.0
    %1188 = vmatpush.msra.mxu0 0.0
    %1189 = vmatpush.msra.mxu0 0.0
    %1190 = vmatpush.msra.mxu0 0.0
    %1191 = vmatpush.msra.mxu0 %v1053
    %1192 = vmatpush.msra.mxu0 %v1052
    %1193 = vmatmul.f32.gmra.mxu0 %v1157
    %v1194 = vpop.f32.mrf.mxu0
    %v1195 = vadd.f32 %v1128, %v1194
    %1196 = vmatmul.f32.gmra.mxu0 %v1159
    %v1197 = vpop.f32.mrf.mxu0
    %v1198 = vadd.f32 %v1131, %v1197
    %1199 = vmatmul.f32.gmra.mxu0 %v1161
    %v1200 = vpop.f32.mrf.mxu0
    %v1201 = vadd.f32 %v1134, %v1200
    %1202 = vmatmul.f32.gmra.mxu0 %v1163
    %v1203 = vpop.f32.mrf.mxu0
    %v1204 = vadd.f32 %v1137, %v1203
    %1205 = vmatmul.f32.gmra.mxu0 %v1165
    %v1206 = vpop.f32.mrf.mxu0
    %v1207 = vadd.f32 %v1140, %v1206
    %1208 = vmatmul.f32.gmra.mxu0 %v1167
    %v1209 = vpop.f32.mrf.mxu0
    %v1210 = vadd.f32 %v1143, %v1209
    %1211 = vmatmul.f32.gmra.mxu0 %v1169
    %v1212 = vpop.f32.mrf.mxu0
    %v1213 = vadd.f32 %v1146, %v1212
    %1214 = vmatmul.f32.gmra.mxu0 %v1171
    %v1215 = vpop.f32.mrf.mxu0
    %v1216 = vadd.f32 %v1149, %v1215
    %1217 = vmatmul.f32.gmra.mxu0 %v1173
    %v1218 = vpop.f32.mrf.mxu0
    %v1219 = vadd.f32 %v1152, %v1218
    %1220 = vmatmul.f32.gmra.mxu0 %v1175
    %v1221 = vpop.f32.mrf.mxu0
    %v1222 = vadd.f32 %v1155, %v1221
    %1223 = vdwg.mxu0
    %s1224 = scalar_lea.vmem %s5, 32
    %v1225 = vld [vmem:[%s1224] sm:$0xff]
    %v1226 = vld [vmem:[%s1224 + $0x8] sm:$0xff]
    %v1227 = vrot.slane %v1040, 2
    %v1228 = vrot.slane %v1041, 2
    %v1229 = vsel %vm394, %v1227, %v1228
    %v1230 = vrot.slane %v1042, 2
    %v1231 = vsel %vm394, %v1228, %v1230
    %v1232 = vrot.slane %v1043, 2
    %v1233 = vsel %vm394, %v1230, %v1232
    %v1234 = vrot.slane %v1044, 2
    %v1235 = vsel %vm394, %v1232, %v1234
    %v1236 = vrot.slane %v1045, 2
    %v1237 = vsel %vm394, %v1234, %v1236
    %v1238 = vrot.slane %v1046, 2
    %v1239 = vsel %vm394, %v1236, %v1238
    %v1240 = vrot.slane %v1047, 2
    %v1241 = vsel %vm394, %v1238, %v1240
    %v1242 = vrot.slane %v1048, 2
    %v1243 = vsel %vm394, %v1240, %v1242
    %v1244 = vrot.slane %v1049, 2
    %v1245 = vsel %vm394, %v1242, %v1244
    %v1246 = vrot.slane %v1050, 2
    %v1247 = vsel %vm394, %v1244, %v1246
    %v1248 = vsel %vm1089, %v1229, 0
    %v1250 = vsel %vm1089, %v1231, 0
    %v1252 = vsel %vm1089, %v1233, 0
    %v1254 = vsel %vm1089, %v1235, 0
    %v1256 = vsel %vm1089, %v1237, 0
    %v1258 = vsel %vm1089, %v1239, 0
    %v1260 = vsel %vm1089, %v1241, 0
    %v1262 = vsel %vm1089, %v1243, 0
    %v1264 = vsel %vm1089, %v1245, 0
    %v1266 = vsel %vm1089, %v1247, 0
    %1268 = vmatpush.msra.mxu0 0.0
    %1269 = vmatpush.msra.mxu0 0.0
    %1270 = vmatpush.msra.mxu0 0.0
    %1271 = vmatpush.msra.mxu0 0.0
    %1272 = vmatpush.msra.mxu0 0.0
    %1273 = vmatpush.msra.mxu0 0.0
    %1274 = vmatpush.msra.mxu0 0.0
    %1275 = vmatpush.msra.mxu0 0.0
    %1276 = vmatpush.msra.mxu0 0.0
    %1277 = vmatpush.msra.mxu0 0.0
    %1278 = vmatpush.msra.mxu0 0.0
    %1279 = vmatpush.msra.mxu0 0.0
    %1280 = vmatpush.msra.mxu0 0.0
    %1281 = vmatpush.msra.mxu0 0.0
    %1282 = vmatpush.msra.mxu0 %v1226
    %1283 = vmatpush.msra.mxu0 %v1225
    %1284 = vmatmul.f32.gmra.mxu0 %v1248
    %v1285 = vpop.f32.mrf.mxu0
    %v1286 = vadd.f32 0.0, %v1285
    %1287 = vmatmul.f32.gmra.mxu0 %v1250
    %v1288 = vpop.f32.mrf.mxu0
    %v1289 = vadd.f32 0.0, %v1288
    %1290 = vmatmul.f32.gmra.mxu0 %v1252
    %v1291 = vpop.f32.mrf.mxu0
    %v1292 = vadd.f32 0.0, %v1291
    %1293 = vmatmul.f32.gmra.mxu0 %v1254
    %v1294 = vpop.f32.mrf.mxu0
    %v1295 = vadd.f32 0.0, %v1294
    %1296 = vmatmul.f32.gmra.mxu0 %v1256
    %v1297 = vpop.f32.mrf.mxu0
    %v1298 = vadd.f32 0.0, %v1297
    %1299 = vmatmul.f32.gmra.mxu0 %v1258
    %v1300 = vpop.f32.mrf.mxu0
    %v1301 = vadd.f32 0.0, %v1300
    %1302 = vmatmul.f32.gmra.mxu0 %v1260
    %v1303 = vpop.f32.mrf.mxu0
    %v1304 = vadd.f32 0.0, %v1303
    %1305 = vmatmul.f32.gmra.mxu0 %v1262
    %v1306 = vpop.f32.mrf.mxu0
    %v1307 = vadd.f32 0.0, %v1306
    %1308 = vmatmul.f32.gmra.mxu0 %v1264
    %v1309 = vpop.f32.mrf.mxu0
    %v1310 = vadd.f32 0.0, %v1309
    %1311 = vmatmul.f32.gmra.mxu0 %v1266
    %v1312 = vpop.f32.mrf.mxu0
    %v1313 = vadd.f32 0.0, %v1312
    %1314 = vdwg.mxu0
    %v1315 = vadd.f32 %v1195, %v1286
    %v1316 = vadd.f32 %v1198, %v1289
    %v1317 = vadd.f32 %v1201, %v1292
    %v1318 = vadd.f32 %v1204, %v1295
    %v1319 = vadd.f32 %v1207, %v1298
    %v1320 = vadd.f32 %v1210, %v1301
    %v1321 = vadd.f32 %v1213, %v1304
    %v1322 = vadd.f32 %v1216, %v1307
    %v1323 = vadd.f32 %v1219, %v1310
    %v1324 = vadd.f32 %v1222, %v1313
    %s1325 = scalar_lea.vmem %s5, 48
    %v1326 = vld [vmem:[%s1325] sm:$0xff]
    %v1327 = vld [vmem:[%s1325 + $0x8] sm:$0xff]
    %v1328 = vrot.slane %v1040, 7
    %v1329 = vrot.slane %v1041, 7
    %v1330 = vsel %vm511, %v1328, %v1329
    %v1331 = vrot.slane %v1042, 7
    %v1332 = vsel %vm511, %v1329, %v1331
    %v1333 = vrot.slane %v1043, 7
    %v1334 = vsel %vm511, %v1331, %v1333
    %v1335 = vrot.slane %v1044, 7
    %v1336 = vsel %vm511, %v1333, %v1335
    %v1337 = vrot.slane %v1045, 7
    %v1338 = vsel %vm511, %v1335, %v1337
    %v1339 = vrot.slane %v1046, 7
    %v1340 = vsel %vm511, %v1337, %v1339
    %v1341 = vrot.slane %v1047, 7
    %v1342 = vsel %vm511, %v1339, %v1341
    %v1343 = vrot.slane %v1048, 7
    %v1344 = vsel %vm511, %v1341, %v1343
    %v1345 = vrot.slane %v1049, 7
    %v1346 = vsel %vm511, %v1343, %v1345
    %v1347 = vrot.slane %v1050, 7
    %v1348 = vsel %vm511, %v1345, %v1347
    %v1349 = vsel %vm1089, %v1330, 0
    %v1351 = vsel %vm1089, %v1332, 0
    %v1353 = vsel %vm1089, %v1334, 0
    %v1355 = vsel %vm1089, %v1336, 0
    %v1357 = vsel %vm1089, %v1338, 0
    %v1359 = vsel %vm1089, %v1340, 0
    %v1361 = vsel %vm1089, %v1342, 0
    %v1363 = vsel %vm1089, %v1344, 0
    %v1365 = vsel %vm1089, %v1346, 0
    %v1367 = vsel %vm1089, %v1348, 0
    %1369 = vmatpush.msra.mxu0 0.0
    %1370 = vmatpush.msra.mxu0 0.0
    %1371 = vmatpush.msra.mxu0 0.0
    %1372 = vmatpush.msra.mxu0 0.0
    %1373 = vmatpush.msra.mxu0 0.0
    %1374 = vmatpush.msra.mxu0 0.0
    %1375 = vmatpush.msra.mxu0 0.0
    %1376 = vmatpush.msra.mxu0 0.0
    %1377 = vmatpush.msra.mxu0 0.0
    %1378 = vmatpush.msra.mxu0 0.0
    %1379 = vmatpush.msra.mxu0 0.0
    %1380 = vmatpush.msra.mxu0 0.0
    %1381 = vmatpush.msra.mxu0 0.0
    %1382 = vmatpush.msra.mxu0 0.0
    %1383 = vmatpush.msra.mxu0 %v1327
    %1384 = vmatpush.msra.mxu0 %v1326
    %1385 = vmatmul.f32.gmra.mxu0 %v1349
    %v1386 = vpop.f32.mrf.mxu0
    %v1387 = vadd.f32 0.0, %v1386
    %1388 = vmatmul.f32.gmra.mxu0 %v1351
    %v1389 = vpop.f32.mrf.mxu0
    %v1390 = vadd.f32 0.0, %v1389
    %1391 = vmatmul.f32.gmra.mxu0 %v1353
    %v1392 = vpop.f32.mrf.mxu0
    %v1393 = vadd.f32 0.0, %v1392
    %1394 = vmatmul.f32.gmra.mxu0 %v1355
    %v1395 = vpop.f32.mrf.mxu0
    %v1396 = vadd.f32 0.0, %v1395
    %1397 = vmatmul.f32.gmra.mxu0 %v1357
    %v1398 = vpop.f32.mrf.mxu0
    %v1399 = vadd.f32 0.0, %v1398
    %1400 = vmatmul.f32.gmra.mxu0 %v1359
    %v1401 = vpop.f32.mrf.mxu0
    %v1402 = vadd.f32 0.0, %v1401
    %1403 = vmatmul.f32.gmra.mxu0 %v1361
    %v1404 = vpop.f32.mrf.mxu0
    %v1405 = vadd.f32 0.0, %v1404
    %1406 = vmatmul.f32.gmra.mxu0 %v1363
    %v1407 = vpop.f32.mrf.mxu0
    %v1408 = vadd.f32 0.0, %v1407
    %1409 = vmatmul.f32.gmra.mxu0 %v1365
    %v1410 = vpop.f32.mrf.mxu0
    %v1411 = vadd.f32 0.0, %v1410
    %1412 = vmatmul.f32.gmra.mxu0 %v1367
    %v1413 = vpop.f32.mrf.mxu0
    %v1414 = vadd.f32 0.0, %v1413
    %1415 = vdwg.mxu0
    %v1416 = vadd.f32 %v1315, %v1387
    %v1417 = vadd.f32 %v1316, %v1390
    %v1418 = vadd.f32 %v1317, %v1393
    %v1419 = vadd.f32 %v1318, %v1396
    %v1420 = vadd.f32 %v1319, %v1399
    %v1421 = vadd.f32 %v1320, %v1402
    %v1422 = vadd.f32 %v1321, %v1405
    %v1423 = vadd.f32 %v1322, %v1408
    %v1424 = vadd.f32 %v1323, %v1411
    %v1425 = vadd.f32 %v1324, %v1414
    %s1426 = scalar_lea.vmem %s5, 64
    %v1427 = vld [vmem:[%s1426] sm:$0xff]
    %v1428 = vld [vmem:[%s1426 + $0x8] sm:$0xff]
    %v1429 = vsel %vm1089, %v1050, 0
    %1431 = vmatpush.msra.mxu0 0.0
    %1432 = vmatpush.msra.mxu0 0.0
    %1433 = vmatpush.msra.mxu0 0.0
    %1434 = vmatpush.msra.mxu0 0.0
    %1435 = vmatpush.msra.mxu0 0.0
    %1436 = vmatpush.msra.mxu0 0.0
    %1437 = vmatpush.msra.mxu0 0.0
    %1438 = vmatpush.msra.mxu0 0.0
    %1439 = vmatpush.msra.mxu0 0.0
    %1440 = vmatpush.msra.mxu0 0.0
    %1441 = vmatpush.msra.mxu0 0.0
    %1442 = vmatpush.msra.mxu0 0.0
    %1443 = vmatpush.msra.mxu0 0.0
    %1444 = vmatpush.msra.mxu0 0.0
    %1445 = vmatpush.msra.mxu0 %v1428
    %1446 = vmatpush.msra.mxu0 %v1427
    %1447 = vmatmul.f32.gmra.mxu0 %v1159
    %v1448 = vpop.f32.mrf.mxu0
    %v1449 = vadd.f32 0.0, %v1448
    %1450 = vmatmul.f32.gmra.mxu0 %v1161
    %v1451 = vpop.f32.mrf.mxu0
    %v1452 = vadd.f32 0.0, %v1451
    %1453 = vmatmul.f32.gmra.mxu0 %v1163
    %v1454 = vpop.f32.mrf.mxu0
    %v1455 = vadd.f32 0.0, %v1454
    %1456 = vmatmul.f32.gmra.mxu0 %v1165
    %v1457 = vpop.f32.mrf.mxu0
    %v1458 = vadd.f32 0.0, %v1457
    %1459 = vmatmul.f32.gmra.mxu0 %v1167
    %v1460 = vpop.f32.mrf.mxu0
    %v1461 = vadd.f32 0.0, %v1460
    %1462 = vmatmul.f32.gmra.mxu0 %v1169
    %v1463 = vpop.f32.mrf.mxu0
    %v1464 = vadd.f32 0.0, %v1463
    %1465 = vmatmul.f32.gmra.mxu0 %v1171
    %v1466 = vpop.f32.mrf.mxu0
    %v1467 = vadd.f32 0.0, %v1466
    %1468 = vmatmul.f32.gmra.mxu0 %v1173
    %v1469 = vpop.f32.mrf.mxu0
    %v1470 = vadd.f32 0.0, %v1469
    %1471 = vmatmul.f32.gmra.mxu0 %v1175
    %v1472 = vpop.f32.mrf.mxu0
    %v1473 = vadd.f32 0.0, %v1472
    %1474 = vmatmul.f32.gmra.mxu0 %v1429
    %v1475 = vpop.f32.mrf.mxu0
    %v1476 = vadd.f32 0.0, %v1475
    %1477 = vdwg.mxu0
    %v1478 = vadd.f32 %v1416, %v1449
    %v1479 = vadd.f32 %v1417, %v1452
    %v1480 = vadd.f32 %v1418, %v1455
    %v1481 = vadd.f32 %v1419, %v1458
    %v1482 = vadd.f32 %v1420, %v1461
    %v1483 = vadd.f32 %v1421, %v1464
    %v1484 = vadd.f32 %v1422, %v1467
    %v1485 = vadd.f32 %v1423, %v1470
    %v1486 = vadd.f32 %v1424, %v1473
    %v1487 = vadd.f32 %v1425, %v1476
    %s1488 = scalar_lea.vmem %s5, 80
    %v1489 = vld [vmem:[%s1488] sm:$0xff]
    %v1490 = vld [vmem:[%s1488 + $0x8] sm:$0xff]
    %v1492 = vrot.slane %v1051, 1
    %v1493 = vsel %vm211, %v1087, %v1492
    %v1494 = vsel %vm1089, %v1493, 0
    %1496 = vmatpush.msra.mxu0 0.0
    %1497 = vmatpush.msra.mxu0 0.0
    %1498 = vmatpush.msra.mxu0 0.0
    %1499 = vmatpush.msra.mxu0 0.0
    %1500 = vmatpush.msra.mxu0 0.0
    %1501 = vmatpush.msra.mxu0 0.0
    %1502 = vmatpush.msra.mxu0 0.0
    %1503 = vmatpush.msra.mxu0 0.0
    %1504 = vmatpush.msra.mxu0 0.0
    %1505 = vmatpush.msra.mxu0 0.0
    %1506 = vmatpush.msra.mxu0 0.0
    %1507 = vmatpush.msra.mxu0 0.0
    %1508 = vmatpush.msra.mxu0 0.0
    %1509 = vmatpush.msra.mxu0 0.0
    %1510 = vmatpush.msra.mxu0 %v1490
    %1511 = vmatpush.msra.mxu0 %v1489
    %1512 = vmatmul.f32.gmra.mxu0 %v1092
    %v1513 = vpop.f32.mrf.mxu0
    %v1514 = vadd.f32 0.0, %v1513
    %1515 = vmatmul.f32.gmra.mxu0 %v1094
    %v1516 = vpop.f32.mrf.mxu0
    %v1517 = vadd.f32 0.0, %v1516
    %1518 = vmatmul.f32.gmra.mxu0 %v1096
    %v1519 = vpop.f32.mrf.mxu0
    %v1520 = vadd.f32 0.0, %v1519
    %1521 = vmatmul.f32.gmra.mxu0 %v1098
    %v1522 = vpop.f32.mrf.mxu0
    %v1523 = vadd.f32 0.0, %v1522
    %1524 = vmatmul.f32.gmra.mxu0 %v1100
    %v1525 = vpop.f32.mrf.mxu0
    %v1526 = vadd.f32 0.0, %v1525
    %1527 = vmatmul.f32.gmra.mxu0 %v1102
    %v1528 = vpop.f32.mrf.mxu0
    %v1529 = vadd.f32 0.0, %v1528
    %1530 = vmatmul.f32.gmra.mxu0 %v1104
    %v1531 = vpop.f32.mrf.mxu0
    %v1532 = vadd.f32 0.0, %v1531
    %1533 = vmatmul.f32.gmra.mxu0 %v1106
    %v1534 = vpop.f32.mrf.mxu0
    %v1535 = vadd.f32 0.0, %v1534
    %1536 = vmatmul.f32.gmra.mxu0 %v1108
    %v1537 = vpop.f32.mrf.mxu0
    %v1538 = vadd.f32 0.0, %v1537
    %1539 = vmatmul.f32.gmra.mxu0 %v1494
    %v1540 = vpop.f32.mrf.mxu0
    %v1541 = vadd.f32 0.0, %v1540
    %1542 = vdwg.mxu0
    %v1543 = vadd.f32 %v1478, %v1514
    %v1544 = vadd.f32 %v1479, %v1517
    %v1545 = vadd.f32 %v1480, %v1520
    %v1546 = vadd.f32 %v1481, %v1523
    %v1547 = vadd.f32 %v1482, %v1526
    %v1548 = vadd.f32 %v1483, %v1529
    %v1549 = vadd.f32 %v1484, %v1532
    %v1550 = vadd.f32 %v1485, %v1535
    %v1551 = vadd.f32 %v1486, %v1538
    %v1552 = vadd.f32 %v1487, %v1541
    %s1553 = scalar_lea.vmem %s5, 96
    %v1554 = vld [vmem:[%s1553] sm:$0xff]
    %v1555 = vld [vmem:[%s1553 + $0x8] sm:$0xff]
    %v1556 = vrot.slane %v1041, 6
    %v1557 = vrot.slane %v1042, 6
    %v1558 = vsel %vm769, %v1556, %v1557
    %v1559 = vrot.slane %v1043, 6
    %v1560 = vsel %vm769, %v1557, %v1559
    %v1561 = vrot.slane %v1044, 6
    %v1562 = vsel %vm769, %v1559, %v1561
    %v1563 = vrot.slane %v1045, 6
    %v1564 = vsel %vm769, %v1561, %v1563
    %v1565 = vrot.slane %v1046, 6
    %v1566 = vsel %vm769, %v1563, %v1565
    %v1567 = vrot.slane %v1047, 6
    %v1568 = vsel %vm769, %v1565, %v1567
    %v1569 = vrot.slane %v1048, 6
    %v1570 = vsel %vm769, %v1567, %v1569
    %v1571 = vrot.slane %v1049, 6
    %v1572 = vsel %vm769, %v1569, %v1571
    %v1573 = vrot.slane %v1050, 6
    %v1574 = vsel %vm769, %v1571, %v1573
    %v1575 = vrot.slane %v1051, 6
    %v1576 = vsel %vm769, %v1573, %v1575
    %v1577 = vsel %vm1089, %v1558, 0
    %v1579 = vsel %vm1089, %v1560, 0
    %v1581 = vsel %vm1089, %v1562, 0
    %v1583 = vsel %vm1089, %v1564, 0
    %v1585 = vsel %vm1089, %v1566, 0
    %v1587 = vsel %vm1089, %v1568, 0
    %v1589 = vsel %vm1089, %v1570, 0
    %v1591 = vsel %vm1089, %v1572, 0
    %v1593 = vsel %vm1089, %v1574, 0
    %v1595 = vsel %vm1089, %v1576, 0
    %1597 = vmatpush.msra.mxu0 0.0
    %1598 = vmatpush.msra.mxu0 0.0
    %1599 = vmatpush.msra.mxu0 0.0
    %1600 = vmatpush.msra.mxu0 0.0
    %1601 = vmatpush.msra.mxu0 0.0
    %1602 = vmatpush.msra.mxu0 0.0
    %1603 = vmatpush.msra.mxu0 0.0
    %1604 = vmatpush.msra.mxu0 0.0
    %1605 = vmatpush.msra.mxu0 0.0
    %1606 = vmatpush.msra.mxu0 0.0
    %1607 = vmatpush.msra.mxu0 0.0
    %1608 = vmatpush.msra.mxu0 0.0
    %1609 = vmatpush.msra.mxu0 0.0
    %1610 = vmatpush.msra.mxu0 0.0
    %1611 = vmatpush.msra.mxu0 %v1555
    %1612 = vmatpush.msra.mxu0 %v1554
    %1613 = vmatmul.f32.gmra.mxu0 %v1577
    %v1614 = vpop.f32.mrf.mxu0
    %v1615 = vadd.f32 0.0, %v1614
    %1616 = vmatmul.f32.gmra.mxu0 %v1579
    %v1617 = vpop.f32.mrf.mxu0
    %v1618 = vadd.f32 0.0, %v1617
    %1619 = vmatmul.f32.gmra.mxu0 %v1581
    %v1620 = vpop.f32.mrf.mxu0
    %v1621 = vadd.f32 0.0, %v1620
    %1622 = vmatmul.f32.gmra.mxu0 %v1583
    %v1623 = vpop.f32.mrf.mxu0
    %v1624 = vadd.f32 0.0, %v1623
    %1625 = vmatmul.f32.gmra.mxu0 %v1585
    %v1626 = vpop.f32.mrf.mxu0
    %v1627 = vadd.f32 0.0, %v1626
    %1628 = vmatmul.f32.gmra.mxu0 %v1587
    %v1629 = vpop.f32.mrf.mxu0
    %v1630 = vadd.f32 0.0, %v1629
    %1631 = vmatmul.f32.gmra.mxu0 %v1589
    %v1632 = vpop.f32.mrf.mxu0
    %v1633 = vadd.f32 0.0, %v1632
    %1634 = vmatmul.f32.gmra.mxu0 %v1591
    %v1635 = vpop.f32.mrf.mxu0
    %v1636 = vadd.f32 0.0, %v1635
    %1637 = vmatmul.f32.gmra.mxu0 %v1593
    %v1638 = vpop.f32.mrf.mxu0
    %v1639 = vadd.f32 0.0, %v1638
    %1640 = vmatmul.f32.gmra.mxu0 %v1595
    %v1641 = vpop.f32.mrf.mxu0
    %v1642 = vadd.f32 0.0, %v1641
    %1643 = vdwg.mxu0
    %v1644 = vadd.f32 %v1543, %v1615
    %v1645 = vadd.f32 %v1544, %v1618
    %v1646 = vadd.f32 %v1545, %v1621
    %v1647 = vadd.f32 %v1546, %v1624
    %v1648 = vadd.f32 %v1547, %v1627
    %v1649 = vadd.f32 %v1548, %v1630
    %v1650 = vadd.f32 %v1549, %v1633
    %v1651 = vadd.f32 %v1550, %v1636
    %v1652 = vadd.f32 %v1551, %v1639
    %v1653 = vadd.f32 %v1552, %v1642
    %s1654 = scalar_lea.vmem %s5, 112
    %v1655 = vld [vmem:[%s1654] sm:$0xff]
    %v1656 = vld [vmem:[%s1654 + $0x8] sm:$0xff]
    %v1657 = vrot.slane %v1051, 7
    %v1658 = vsel %vm511, %v1347, %v1657
    %v1659 = vsel %vm1089, %v1658, 0
    %1661 = vmatpush.msra.mxu0 0.0
    %1662 = vmatpush.msra.mxu0 0.0
    %1663 = vmatpush.msra.mxu0 0.0
    %1664 = vmatpush.msra.mxu0 0.0
    %1665 = vmatpush.msra.mxu0 0.0
    %1666 = vmatpush.msra.mxu0 0.0
    %1667 = vmatpush.msra.mxu0 0.0
    %1668 = vmatpush.msra.mxu0 0.0
    %1669 = vmatpush.msra.mxu0 0.0
    %1670 = vmatpush.msra.mxu0 0.0
    %1671 = vmatpush.msra.mxu0 0.0
    %1672 = vmatpush.msra.mxu0 0.0
    %1673 = vmatpush.msra.mxu0 0.0
    %1674 = vmatpush.msra.mxu0 0.0
    %1675 = vmatpush.msra.mxu0 %v1656
    %1676 = vmatpush.msra.mxu0 %v1655
    %1677 = vmatmul.f32.gmra.mxu0 %v1351
    %v1678 = vpop.f32.mrf.mxu0
    %v1679 = vadd.f32 0.0, %v1678
    %1680 = vmatmul.f32.gmra.mxu0 %v1353
    %v1681 = vpop.f32.mrf.mxu0
    %v1682 = vadd.f32 0.0, %v1681
    %1683 = vmatmul.f32.gmra.mxu0 %v1355
    %v1684 = vpop.f32.mrf.mxu0
    %v1685 = vadd.f32 0.0, %v1684
    %1686 = vmatmul.f32.gmra.mxu0 %v1357
    %v1687 = vpop.f32.mrf.mxu0
    %v1688 = vadd.f32 0.0, %v1687
    %1689 = vmatmul.f32.gmra.mxu0 %v1359
    %v1690 = vpop.f32.mrf.mxu0
    %v1691 = vadd.f32 0.0, %v1690
    %1692 = vmatmul.f32.gmra.mxu0 %v1361
    %v1693 = vpop.f32.mrf.mxu0
    %v1694 = vadd.f32 0.0, %v1693
    %1695 = vmatmul.f32.gmra.mxu0 %v1363
    %v1696 = vpop.f32.mrf.mxu0
    %v1697 = vadd.f32 0.0, %v1696
    %1698 = vmatmul.f32.gmra.mxu0 %v1365
    %v1699 = vpop.f32.mrf.mxu0
    %v1700 = vadd.f32 0.0, %v1699
    %1701 = vmatmul.f32.gmra.mxu0 %v1367
    %v1702 = vpop.f32.mrf.mxu0
    %v1703 = vadd.f32 0.0, %v1702
    %1704 = vmatmul.f32.gmra.mxu0 %v1659
    %v1705 = vpop.f32.mrf.mxu0
    %v1706 = vadd.f32 0.0, %v1705
    %1707 = vdwg.mxu0
    %v1708 = vadd.f32 %v1644, %v1679
    %v1709 = vadd.f32 %v1645, %v1682
    %v1710 = vadd.f32 %v1646, %v1685
    %v1711 = vadd.f32 %v1647, %v1688
    %v1712 = vadd.f32 %v1648, %v1691
    %v1713 = vadd.f32 %v1649, %v1694
    %v1714 = vadd.f32 %v1650, %v1697
    %v1715 = vadd.f32 %v1651, %v1700
    %v1716 = vadd.f32 %v1652, %v1703
    %v1717 = vadd.f32 %v1653, %v1706
    %s1718 = scalar_lea.vmem %s5, 128
    %v1719 = vld [vmem:[%s1718] sm:$0xff]
    %v1720 = vld [vmem:[%s1718 + $0x8] sm:$0xff]
    %v1721 = vsel %vm1089, %v1051, 0
    %1723 = vmatpush.msra.mxu0 0.0
    %1724 = vmatpush.msra.mxu0 0.0
    %1725 = vmatpush.msra.mxu0 0.0
    %1726 = vmatpush.msra.mxu0 0.0
    %1727 = vmatpush.msra.mxu0 0.0
    %1728 = vmatpush.msra.mxu0 0.0
    %1729 = vmatpush.msra.mxu0 0.0
    %1730 = vmatpush.msra.mxu0 0.0
    %1731 = vmatpush.msra.mxu0 0.0
    %1732 = vmatpush.msra.mxu0 0.0
    %1733 = vmatpush.msra.mxu0 0.0
    %1734 = vmatpush.msra.mxu0 0.0
    %1735 = vmatpush.msra.mxu0 0.0
    %1736 = vmatpush.msra.mxu0 0.0
    %1737 = vmatpush.msra.mxu0 %v1720
    %1738 = vmatpush.msra.mxu0 %v1719
    %1739 = vmatmul.f32.gmra.mxu0 %v1161
    %v1740 = vpop.f32.mrf.mxu0
    %v1741 = vadd.f32 0.0, %v1740
    %1742 = vmatmul.f32.gmra.mxu0 %v1163
    %v1743 = vpop.f32.mrf.mxu0
    %v1744 = vadd.f32 0.0, %v1743
    %1745 = vmatmul.f32.gmra.mxu0 %v1165
    %v1746 = vpop.f32.mrf.mxu0
    %v1747 = vadd.f32 0.0, %v1746
    %1748 = vmatmul.f32.gmra.mxu0 %v1167
    %v1749 = vpop.f32.mrf.mxu0
    %v1750 = vadd.f32 0.0, %v1749
    %1751 = vmatmul.f32.gmra.mxu0 %v1169
    %v1752 = vpop.f32.mrf.mxu0
    %v1753 = vadd.f32 0.0, %v1752
    %1754 = vmatmul.f32.gmra.mxu0 %v1171
    %v1755 = vpop.f32.mrf.mxu0
    %v1756 = vadd.f32 0.0, %v1755
    %1757 = vmatmul.f32.gmra.mxu0 %v1173
    %v1758 = vpop.f32.mrf.mxu0
    %v1759 = vadd.f32 0.0, %v1758
    %1760 = vmatmul.f32.gmra.mxu0 %v1175
    %v1761 = vpop.f32.mrf.mxu0
    %v1762 = vadd.f32 0.0, %v1761
    %1763 = vmatmul.f32.gmra.mxu0 %v1429
    %v1764 = vpop.f32.mrf.mxu0
    %v1765 = vadd.f32 0.0, %v1764
    %1766 = vmatmul.f32.gmra.mxu0 %v1721
    %v1767 = vpop.f32.mrf.mxu0
    %v1768 = vadd.f32 0.0, %v1767
    %1769 = vdwg.mxu0
    %v1770 = vadd.f32 %v1708, %v1741
    %v1771 = vadd.f32 %v1709, %v1744
    %v1772 = vadd.f32 %v1710, %v1747
    %v1773 = vadd.f32 %v1711, %v1750
    %v1774 = vadd.f32 %v1712, %v1753
    %v1775 = vadd.f32 %v1713, %v1756
    %v1776 = vadd.f32 %v1714, %v1759
    %v1777 = vadd.f32 %v1715, %v1762
    %v1778 = vadd.f32 %v1716, %v1765
    %v1779 = vadd.f32 %v1717, %v1768
    %v1780 = vld [vmem:[%s6] sm:$0x1]
    %v1782 = vperm.slane %v1780, 0
    %v1784 = vadd.f32 %v1770, %v1782
    %v1785 = vadd.f32 %v1771, %v1782
    %v1786 = vadd.f32 %v1772, %v1782
    %v1787 = vadd.f32 %v1773, %v1782
    %v1788 = vadd.f32 %v1774, %v1782
    %v1789 = vadd.f32 %v1775, %v1782
    %v1790 = vadd.f32 %v1776, %v1782
    %v1791 = vadd.f32 %v1777, %v1782
    %v1792 = vadd.f32 %v1778, %v1782
    %v1793 = vadd.f32 %v1779, %v1782
    %v1794 = vmax.f32 %v1784, 0.0
    %v1795 = vmax.f32 %v1785, 0.0
    %v1796 = vmax.f32 %v1786, 0.0
    %v1797 = vmax.f32 %v1787, 0.0
    %v1798 = vmax.f32 %v1788, 0.0
    %v1799 = vmax.f32 %v1789, 0.0
    %v1800 = vmax.f32 %v1790, 0.0
    %v1801 = vmax.f32 %v1791, 0.0
    %v1802 = vmax.f32 %v1792, 0.0
    %v1803 = vmax.f32 %v1793, 0.0
    %v1804 = vld [vmem:[%s7] sm:$0x3]
    %vm1805 = vcmask 654336
    %v1807 = vsel %vm1805, %v1804, 0
    %1809 = vmatpush.msra.mxu0 0.0
    %1810 = vmatpush.msra.mxu0 0.0
    %1811 = vmatpush.msra.mxu0 0.0
    %1812 = vmatpush.msra.mxu0 0.0
    %1813 = vmatpush.msra.mxu0 0.0
    %1814 = vmatpush.msra.mxu0 0.0
    %1815 = vmatpush.msra.mxu0 %v1803
    %1816 = vmatpush.msra.mxu0 %v1802
    %1817 = vmatpush.msra.mxu0 %v1801
    %1818 = vmatpush.msra.mxu0 %v1800
    %1819 = vmatpush.msra.mxu0 %v1799
    %1820 = vmatpush.msra.mxu0 %v1798
    %1821 = vmatpush.msra.mxu0 %v1797
    %1822 = vmatpush.msra.mxu0 %v1796
    %1823 = vmatpush.msra.mxu0 %v1795
    %1824 = vmatpush.msra.mxu0 %v1794
    %1825 = vmatmul.f32.gmra.mxu0 %v1807
    %v1826 = vpop.f32.mrf.mxu0
    %v1827 = vadd.f32 0.0, %v1826
    %1828 = vdwg.mxu0
    %v1829 = vld [vmem:[%s8] sm:$0xff]
    %v1830 = vld [vmem:[%s8 + $0x8] sm:$0xff]
    %v1831 = vld [vmem:[%s9] sm:$0x1]
    %v1833 = vperm.slane %v1831, 0
    %v1836 = vsel %vm1089, %v1827, 0
    %1838 = vmatpush.msra.mxu0 0.0
    %1839 = vmatpush.msra.mxu0 0.0
    %1840 = vmatpush.msra.mxu0 0.0
    %1841 = vmatpush.msra.mxu0 0.0
    %1842 = vmatpush.msra.mxu0 0.0
    %1843 = vmatpush.msra.mxu0 0.0
    %1844 = vmatpush.msra.mxu0 0.0
    %1845 = vmatpush.msra.mxu0 0.0
    %1846 = vmatpush.msra.mxu0 0.0
    %1847 = vmatpush.msra.mxu0 0.0
    %1848 = vmatpush.msra.mxu0 0.0
    %1849 = vmatpush.msra.mxu0 0.0
    %1850 = vmatpush.msra.mxu0 0.0
    %1851 = vmatpush.msra.mxu0 0.0
    %1852 = vmatpush.msra.mxu0 %v1830
    %1853 = vmatpush.msra.mxu0 %v1829
    %1854 = vmatmul.f32.gmra.mxu0 %v1836
    %v1855 = vpop.f32.mrf.mxu0
    %v1856 = vadd.f32 %v1833, %v1855
    %1857 = vdwg.mxu0
    %v1858 = vmax.f32 %v1856, 0.0
    %vm1859 = vcmask 254976
    %1860 = vst.msk [vmem:[#allocation5] sm:$0x3] %vm1859, %v1858
    // Predicated region
    $region46: #{tpu_custom_call.1} parent=1 // pred_check
      _
    $region47: #{tpu_custom_call.1} parent=1 // pred_check_branch
      %1862 = sbr.rel (0) target = $region49
    $region48: #{tpu_custom_call.1} parent=1 // pred_region
      %1864 = vsyncadd [#allocation4], 0
      %s1866 = sshll.u32 [#allocation5], 4
      %s1867 = int_to_ptr.vmem [resolvable:$true] %s1866
      %s1868 = sshll.u32 %s10, 4
      %s1869 = int_to_ptr.hbm [resolvable:$true] %s1868
      %1871 = dma.vmem_to_hbm [thread:$0]  %s1867, 32, %s1869, [#allocation4]
    $region49: #{tpu_custom_call.1} parent=1 // pred_fallthru
      _
    // Predicated region
    $region50: #{tpu_custom_call.1} parent=1 // pred_check
      _
    $region51: #{tpu_custom_call.1} parent=1 // pred_check_branch
      %1873 = sbr.rel (0) target = $region53
    $region52: #{tpu_custom_call.1} parent=1 // pred_region
      %1875 = dma.done [#allocation4], 32
    $region53: #{tpu_custom_call.1} parent=1 // pred_fallthru
      _
    %1876 = vsyncpa [#allocation3], 1
    %1877 = vsyncpa [#allocation4], 1

</llo_original>
